<compile_context>
chip_gen: v6e
topology: v6e:2x2x1
jax: 0.10.0
libtpu: 0.0.40
codegen_flags: <defaults>
</compile_context>

<pallas_src>
import jax
import jax.numpy as jnp
from jax.experimental import pallas as pl
from jax.experimental.pallas import tpu as pltpu


NUM_ANCHORS = 3


def _round_up(x, m):
    return ((x + m - 1) // m) * m


def _round_down(x, m):
    return (x // m) * m


def _scaled_pred_kernel(x_ref, w_ref, b_ref, o_ref):
    # x_ref: (C_in, T)   w_ref: (C_out, C_in)   b_ref: (C_out, 1)
    # o_ref: (NUM_ANCHORS, T, na)   with C_out = NUM_ANCHORS * na
    acc = jnp.dot(w_ref[...], x_ref[...], preferred_element_type=jnp.float32)
    acc = acc + b_ref[...]                                  # (C_out, T), f32
    na = o_ref.shape[-1]
    # Fused permute: transpose each anchor slab (na, T) -> (T, na) on the XLU
    # (kernel is DMA-bound, XLU slot has slack) and store channel-last.
    for a in range(NUM_ANCHORS):                            # static unroll
        slab = acc[a * na:(a + 1) * na, :]                  # (na, T)
        o_ref[a] = jnp.transpose(slab).astype(o_ref.dtype)  # (T, na)


def _choose_tile_hw(hw, c_in, c_out, itemsize, *, max_tile_hw, vmem_block_budget):
    """Largest lane tile whose double-buffered x/out blocks fit the budget."""
    per_px = 2 * (c_in + c_out) * itemsize                  # double-buffered bytes/px
    cap = max(128, _round_down(max(vmem_block_budget // per_px, 128), 128))
    cap = min(cap, max_tile_hw)
    if hw <= cap:
        return hw        # full-extent last block dim: legal even if not %128
    return cap           # multiple of 128 -> unmasked lane-dense loads/stores


def scaled_prediction_head(x3, w, b, *, max_tile_hw=8192,
                           vmem_block_budget=12 * 1024 * 1024):
    """Fused 1x1-conv + permute.

    x3: (B, C_in, HW)  NCHW flattened over spatial dims (no transpose needed)
    w : (C_out, C_in)  in the compute dtype (bf16 or f32)
    b : (C_out,)       f32 (added after f32 accumulation)
    returns (B, 3, HW, C_out // 3) in x3.dtype
    """
    B, C_in, HW = x3.shape
    C_out = w.shape[0]
    assert C_out % NUM_ANCHORS == 0
    na = C_out // NUM_ANCHORS
    out_dtype = x3.dtype
    itemsize = jnp.dtype(x3.dtype).itemsize
    w_itemsize = jnp.dtype(w.dtype).itemsize

    tile_hw = _choose_tile_hw(HW, C_in, C_out, itemsize,
                              max_tile_hw=max_tile_hw,
                              vmem_block_budget=vmem_block_budget)
    n_hw = -(-HW // tile_hw)
    # v7x megacore: guarantee >= 2 grid steps so both TensorCores get work
    # (and the pipeline gets at least one step of DMA/compute overlap).
    if B * n_hw < 2 and HW > 128:
        tile_hw = min(tile_hw, _round_up(-(-HW // 2), 128))
        n_hw = -(-HW // tile_hw)

    b2d = b.reshape(C_out, 1).astype(jnp.float32)

    # VMEM estimate: double-buffered x/out blocks + (single-buffered) weights.
    x_blk = C_in * tile_hw * itemsize
    o_blk = C_out * tile_hw * jnp.dtype(out_dtype).itemsize
    wb_bytes = C_out * C_in * w_itemsize + C_out * 4
    est_vmem = 2 * (x_blk + o_blk) + 2 * wb_bytes + (1 << 20)
    # >= every generation's default scoped limit we care about, <= v7x physical.
    vmem_limit = int(min(48 << 20, max(32 << 20, 2 * est_vmem)))

    cost = pl.CostEstimate(
        flops=2 * B * HW * C_in * C_out,
        transcendentals=0,
        bytes_accessed=(B * HW * C_in * itemsize
                        + C_out * C_in * w_itemsize
                        + C_out * 4
                        + B * HW * C_out * jnp.dtype(out_dtype).itemsize),
    )

    def _call(single_buffer_weights):
        # Constant index_map -> weights/bias fetched once; Buffered(1) reclaims
        # the never-used second buffer (matters for 255x1024-class heads under
        # v5e's 16 MiB default scoped VMEM / v7x's 64 MiB physical).
        wkw = {"pipeline_mode": pl.Buffered(1)} if single_buffer_weights else {}
        return pl.pallas_call(
            _scaled_pred_kernel,
            out_shape=jax.ShapeDtypeStruct((B, NUM_ANCHORS, HW, na), out_dtype),
            grid_spec=pltpu.PrefetchScalarGridSpec(
                num_scalar_prefetch=0,
                grid=(B, n_hw),                      # non-divisible grid: last
                in_specs=[                           # block padded / masked.
                    pl.BlockSpec((pl.Squeezed(), C_in, tile_hw),
                                 lambda bi, j: (bi, 0, j)),
                    pl.BlockSpec((C_out, C_in), lambda bi, j: (0, 0), **wkw),
                    pl.BlockSpec((C_out, 1), lambda bi, j: (0, 0), **wkw),
                ],
                out_specs=pl.BlockSpec(
                    (pl.Squeezed(), NUM_ANCHORS, tile_hw, na),
                    lambda bi, j: (bi, 0, j, 0)),
            ),
            compiler_params=pltpu.CompilerParams(
                dimension_semantics=("parallel", "parallel"),
                vmem_limit_bytes=vmem_limit,
            ),
            cost_estimate=cost,
        )(x3, w, b2d)

    try:
        return _call(True)
    except Exception:
        # Fallback for toolchains that reject Buffered(1) single-buffering.
        return _call(False)


class ScaledPredictionPallas:
    """JAX/Pallas port of ScaledPrediction (YOLO scaled prediction head)."""

    def __init__(self, in_channels, num_classes, key, *, compute_dtype=jnp.bfloat16):
        self.num_classes = num_classes
        self.in_channels = in_channels
        self.compute_dtype = compute_dtype
        out_channels = (num_classes + 5) * NUM_ANCHORS
        self.out_channels = out_channels
        kw, kb = jax.random.split(key)
        # Conv weight (out, in, 1, 1) -> stored as (C_out, C_in) for W @ X.
        w_oihw = 0.1 * jax.random.normal(
            kw, (out_channels, in_channels, 1, 1), dtype=jnp.float32
        )
        self.w_f32 = w_oihw[:, :, 0, 0]                    # f32 master copy
        self.w = self.w_f32.astype(compute_dtype)          # bf16 stream to MXU
        self.b = 0.1 * jax.random.normal(kb, (out_channels,), dtype=jnp.float32)

    def __call__(self, x):
        # x: (B, C_in, H, W)  NCHW, matching the PyTorch module.
        B, C, H, W = x.shape
        assert C == self.in_channels
        # In a full bf16 network the upstream block already emits compute_dtype,
        # so this cast is a no-op there (only the f32 demo input pays a cast).
        x3 = x.reshape(B, C, H * W).astype(self.compute_dtype)
        y = scaled_prediction_head(x3, self.w, self.b)      # (B, 3, HW, nc+5)
        # Permute already happened in-kernel; this reshape is free (contiguous).
        return y.reshape(B, NUM_ANCHORS, H, W, self.num_classes + 5)


def _reference(x, w, b, num_classes):
    """Plain-JAX reference mirroring the PyTorch forward exactly (f32)."""
    B, C, H, W = x.shape
    y = jnp.einsum("bchw,oc->bohw", x, w) + b[None, :, None, None]
    y = y.reshape(B, 3, num_classes + 5, H, W)
    return jnp.transpose(y, (0, 1, 3, 4, 2))


if __name__ == "__main__":
    key = jax.random.PRNGKey(0)
    k_param, k_x = jax.random.split(key)

    B, C_in, H, W = 2, 4, 16, 16
    num_classes = 3
    expected_shape = (B, 3, H, W, num_classes + 5)

    x = jax.random.normal(k_x, (B, C_in, H, W), dtype=jnp.float32)

    # Default bf16 streams (f32 accumulate): halves HBM traffic, looser check.
    model_bf16 = ScaledPredictionPallas(C_in, num_classes, k_param)
    out_bf16 = jax.block_until_ready(model_bf16(x))
    assert out_bf16.shape == expected_shape, (out_bf16.shape, expected_shape)
    ref = _reference(x, model_bf16.w_f32, model_bf16.b, num_classes)
    assert jnp.allclose(out_bf16.astype(jnp.float32), ref, atol=3e-2, rtol=3e-2), \
        float(jnp.max(jnp.abs(out_bf16.astype(jnp.float32) - ref)))

    # f32 path: tight check against the reference.
    model_f32 = ScaledPredictionPallas(C_in, num_classes, k_param,
                                       compute_dtype=jnp.float32)
    out_f32 = jax.block_until_ready(model_f32(x))
    assert out_f32.shape == expected_shape, (out_f32.shape, expected_shape)
    ref32 = _reference(x, model_f32.w_f32, model_f32.b, num_classes)
    assert jnp.allclose(out_f32, ref32, atol=1e-5, rtol=1e-5), \
        float(jnp.max(jnp.abs(out_f32 - ref32)))

    print("KERNEL_OK")
</pallas_src>

<mosaic_0001>
module attributes {stable_mosaic.version = 11 : i64} {
  func.func @_scaled_pred_kernel(%arg0: i32, %arg1: i32, %arg2: memref<1x4x256xbf16, #tpu.memory_space<vmem>>, %arg3: memref<24x4xbf16, #tpu.memory_space<vmem>>, %arg4: memref<24x1xf32, #tpu.memory_space<vmem>>, %arg5: memref<1x3x256x8xbf16, #tpu.memory_space<vmem>>) attributes {dimension_semantics = [#tpu.dimension_semantics<parallel>, #tpu.dimension_semantics<parallel>], iteration_bounds = array<i64: 2, 1>, scalar_prefetch = 0 : i64, scratch_operands = 0 : i64, tpu.core_type = #tpu.core_type<tc>, window_params = [{transform_indices = @transform_0, window_bounds = array<i64: 1, 4, 256>}, {pipeline_mode = #tpu.pipeline_mode<synchronous>, transform_indices = @transform_1, window_bounds = array<i64: 24, 4>}, {pipeline_mode = #tpu.pipeline_mode<synchronous>, transform_indices = @transform_2, window_bounds = array<i64: 24, 1>}, {transform_indices = @transform_3, window_bounds = array<i64: 1, 3, 256, 8>}]} {
    %c0 = arith.constant 0 : index
    %c0_0 = arith.constant 0 : index
    %0 = vector.load %arg3[%c0, %c0_0] : memref<24x4xbf16, #tpu.memory_space<vmem>>, vector<24x4xbf16>
    %c0_1 = arith.constant 0 : index
    %c0_2 = arith.constant 0 : index
    %c0_3 = arith.constant 0 : index
    %1 = vector.load %arg2[%c0_1, %c0_2, %c0_3] : memref<1x4x256xbf16, #tpu.memory_space<vmem>>, vector<1x4x256xbf16>
    %2 = vector.shape_cast %1 : vector<1x4x256xbf16> to vector<4x256xbf16>
    %cst = arith.constant dense<0.000000e+00> : vector<24x256xf32>
    %3 = tpu.matmul %0, %2, %cst {dimension_numbers = #tpu.dot_dimension_numbers<[1], [0], [0], [1], [0, 0, 1, 1], [], []>} : vector<24x4xbf16>, vector<4x256xbf16>, vector<24x256xf32> -> vector<24x256xf32>
    %c0_4 = arith.constant 0 : index
    %c0_5 = arith.constant 0 : index
    %4 = vector.load %arg4[%c0_4, %c0_5] : memref<24x1xf32, #tpu.memory_space<vmem>>, vector<24x1xf32>
    %5 = vector.broadcast %4 : vector<24x1xf32> to vector<24x256xf32>
    %6 = arith.addf %3, %5 : vector<24x256xf32>
    %7 = vector.extract_strided_slice %6 {offsets = [0, 0], sizes = [8, 256], strides = [1, 1]} : vector<24x256xf32> to vector<8x256xf32>
    %8 = tpu.transpose %7, [1, 0] : vector<8x256xf32> -> vector<256x8xf32>
    %9 = arith.truncf %8 : vector<256x8xf32> to vector<256x8xbf16>
    %c0_6 = arith.constant 0 : index
    %c0_7 = arith.constant 0 : index
    %c0_8 = arith.constant 0 : index
    %c0_9 = arith.constant 0 : index
    %10 = vector.load %arg5[%c0_6, %c0_7, %c0_8, %c0_9] : memref<1x3x256x8xbf16, #tpu.memory_space<vmem>>, vector<1x1x256x8xbf16>
    %11 = vector.shape_cast %10 : vector<1x1x256x8xbf16> to vector<256x8xbf16>
    %12 = vector.shape_cast %9 : vector<256x8xbf16> to vector<1x1x256x8xbf16>
    tpu.vector_store %arg5[%c0_6, %c0_7, %c0_8, %c0_9], %12 {strides = array<i32>} : memref<1x3x256x8xbf16, #tpu.memory_space<vmem>>, vector<1x1x256x8xbf16>,
    %13 = vector.extract_strided_slice %6 {offsets = [8, 0], sizes = [8, 256], strides = [1, 1]} : vector<24x256xf32> to vector<8x256xf32>
    %14 = tpu.transpose %13, [1, 0] : vector<8x256xf32> -> vector<256x8xf32>
    %15 = arith.truncf %14 : vector<256x8xf32> to vector<256x8xbf16>
    %c0_10 = arith.constant 0 : index
    %c1 = arith.constant 1 : index
    %c0_11 = arith.constant 0 : index
    %c0_12 = arith.constant 0 : index
    %16 = vector.load %arg5[%c0_10, %c1, %c0_11, %c0_12] : memref<1x3x256x8xbf16, #tpu.memory_space<vmem>>, vector<1x1x256x8xbf16>
    %17 = vector.shape_cast %16 : vector<1x1x256x8xbf16> to vector<256x8xbf16>
    %18 = vector.shape_cast %15 : vector<256x8xbf16> to vector<1x1x256x8xbf16>
    tpu.vector_store %arg5[%c0_10, %c1, %c0_11, %c0_12], %18 {strides = array<i32>} : memref<1x3x256x8xbf16, #tpu.memory_space<vmem>>, vector<1x1x256x8xbf16>,
    %19 = vector.extract_strided_slice %6 {offsets = [16, 0], sizes = [8, 256], strides = [1, 1]} : vector<24x256xf32> to vector<8x256xf32>
    %20 = tpu.transpose %19, [1, 0] : vector<8x256xf32> -> vector<256x8xf32>
    %21 = arith.truncf %20 : vector<256x8xf32> to vector<256x8xbf16>
    %c0_13 = arith.constant 0 : index
    %c2 = arith.constant 2 : index
    %c0_14 = arith.constant 0 : index
    %c0_15 = arith.constant 0 : index
    %22 = vector.load %arg5[%c0_13, %c2, %c0_14, %c0_15] : memref<1x3x256x8xbf16, #tpu.memory_space<vmem>>, vector<1x1x256x8xbf16>
    %23 = vector.shape_cast %22 : vector<1x1x256x8xbf16> to vector<256x8xbf16>
    %24 = vector.shape_cast %21 : vector<256x8xbf16> to vector<1x1x256x8xbf16>
    tpu.vector_store %arg5[%c0_13, %c2, %c0_14, %c0_15], %24 {strides = array<i32>} : memref<1x3x256x8xbf16, #tpu.memory_space<vmem>>, vector<1x1x256x8xbf16>,
    return
  }
  func.func @transform_0(%arg0: i32, %arg1: i32) -> (i32, i32, i32) {
    %c0_i32 = arith.constant 0 : i32
    %c0_i32_0 = arith.constant 0 : i32
    return %arg0, %c0_i32, %arg1 : i32, i32, i32
  }
  func.func @transform_1(%arg0: i32, %arg1: i32) -> (i32, i32) {
    %c0_i32 = arith.constant 0 : i32
    %c0_i32_0 = arith.constant 0 : i32
    %c0_i32_1 = arith.constant 0 : i32
    return %c0_i32, %c0_i32_0 : i32, i32
  }
  func.func @transform_2(%arg0: i32, %arg1: i32) -> (i32, i32) {
    %c0_i32 = arith.constant 0 : i32
    %c0_i32_0 = arith.constant 0 : i32
    %c0_i32_1 = arith.constant 0 : i32
    return %c0_i32, %c0_i32_0 : i32, i32
  }
  func.func @transform_3(%arg0: i32, %arg1: i32) -> (i32, i32, i32, i32) {
    %c0_i32 = arith.constant 0 : i32
    %c0_i32_0 = arith.constant 0 : i32
    %c0_i32_1 = arith.constant 0 : i32
    return %arg0, %c0_i32, %arg1, %c0_i32_0 : i32, i32, i32, i32
  }
}

module attributes {stable_mosaic.version = 11 : i64} {
  func.func @_scaled_pred_kernel(%arg0: i32, %arg1: i32, %arg2: memref<1x4x256xbf16, #tpu.memory_space<vmem>>, %arg3: memref<24x4xbf16, #tpu.memory_space<vmem>>, %arg4: memref<24x1xf32, #tpu.memory_space<vmem>>, %arg5: memref<1x3x256x8xbf16, #tpu.memory_space<vmem>>) attributes {dimension_semantics = [#tpu.dimension_semantics<parallel>, #tpu.dimension_semantics<parallel>], iteration_bounds = array<i64: 2, 1>, scalar_prefetch = 0 : i64, scratch_operands = 0 : i64, tpu.core_type = #tpu.core_type<tc>, window_params = [{transform_indices = @transform_0, window_bounds = array<i64: 1, 4, 256>}, {pipeline_mode = #tpu.pipeline_mode<synchronous>, transform_indices = @transform_1, window_bounds = array<i64: 24, 4>}, {pipeline_mode = #tpu.pipeline_mode<synchronous>, transform_indices = @transform_2, window_bounds = array<i64: 24, 1>}, {transform_indices = @transform_3, window_bounds = array<i64: 1, 3, 256, 8>}]} {
    %c0 = arith.constant 0 : index
    %c0_0 = arith.constant 0 : index
    %0 = vector.load %arg3[%c0, %c0_0] : memref<24x4xbf16, #tpu.memory_space<vmem>>, vector<24x4xbf16>
    %c0_1 = arith.constant 0 : index
    %c0_2 = arith.constant 0 : index
    %c0_3 = arith.constant 0 : index
    %1 = vector.load %arg2[%c0_1, %c0_2, %c0_3] : memref<1x4x256xbf16, #tpu.memory_space<vmem>>, vector<1x4x256xbf16>
    %2 = vector.shape_cast %1 : vector<1x4x256xbf16> to vector<4x256xbf16>
    %cst = arith.constant dense<0.000000e+00> : vector<24x256xf32>
    %3 = tpu.matmul %0, %2, %cst {dimension_numbers = #tpu.dot_dimension_numbers<[1], [0], [0], [1], [0, 0, 1, 1], [], []>} : vector<24x4xbf16>, vector<4x256xbf16>, vector<24x256xf32> -> vector<24x256xf32>
    %c0_4 = arith.constant 0 : index
    %c0_5 = arith.constant 0 : index
    %4 = vector.load %arg4[%c0_4, %c0_5] : memref<24x1xf32, #tpu.memory_space<vmem>>, vector<24x1xf32>
    %5 = vector.broadcast %4 : vector<24x1xf32> to vector<24x256xf32>
    %6 = arith.addf %3, %5 : vector<24x256xf32>
    %7 = vector.extract_strided_slice %6 {offsets = [0, 0], sizes = [8, 256], strides = [1, 1]} : vector<24x256xf32> to vector<8x256xf32>
    %8 = tpu.transpose %7, [1, 0] : vector<8x256xf32> -> vector<256x8xf32>
    %9 = arith.truncf %8 : vector<256x8xf32> to vector<256x8xbf16>
    %c0_6 = arith.constant 0 : index
    %c0_7 = arith.constant 0 : index
    %c0_8 = arith.constant 0 : index
    %c0_9 = arith.constant 0 : index
    %10 = vector.load %arg5[%c0_6, %c0_7, %c0_8, %c0_9] : memref<1x3x256x8xbf16, #tpu.memory_space<vmem>>, vector<1x1x256x8xbf16>
    %11 = vector.shape_cast %10 : vector<1x1x256x8xbf16> to vector<256x8xbf16>
    %12 = vector.shape_cast %9 : vector<256x8xbf16> to vector<1x1x256x8xbf16>
    tpu.vector_store %arg5[%c0_6, %c0_7, %c0_8, %c0_9], %12 {strides = array<i32>} : memref<1x3x256x8xbf16, #tpu.memory_space<vmem>>, vector<1x1x256x8xbf16>,
    %13 = vector.extract_strided_slice %6 {offsets = [8, 0], sizes = [8, 256], strides = [1, 1]} : vector<24x256xf32> to vector<8x256xf32>
    %14 = tpu.transpose %13, [1, 0] : vector<8x256xf32> -> vector<256x8xf32>
    %15 = arith.truncf %14 : vector<256x8xf32> to vector<256x8xbf16>
    %c0_10 = arith.constant 0 : index
    %c1 = arith.constant 1 : index
    %c0_11 = arith.constant 0 : index
    %c0_12 = arith.constant 0 : index
    %16 = vector.load %arg5[%c0_10, %c1, %c0_11, %c0_12] : memref<1x3x256x8xbf16, #tpu.memory_space<vmem>>, vector<1x1x256x8xbf16>
    %17 = vector.shape_cast %16 : vector<1x1x256x8xbf16> to vector<256x8xbf16>
    %18 = vector.shape_cast %15 : vector<256x8xbf16> to vector<1x1x256x8xbf16>
    tpu.vector_store %arg5[%c0_10, %c1, %c0_11, %c0_12], %18 {strides = array<i32>} : memref<1x3x256x8xbf16, #tpu.memory_space<vmem>>, vector<1x1x256x8xbf16>,
    %19 = vector.extract_strided_slice %6 {offsets = [16, 0], sizes = [8, 256], strides = [1, 1]} : vector<24x256xf32> to vector<8x256xf32>
    %20 = tpu.transpose %19, [1, 0] : vector<8x256xf32> -> vector<256x8xf32>
    %21 = arith.truncf %20 : vector<256x8xf32> to vector<256x8xbf16>
    %c0_13 = arith.constant 0 : index
    %c2 = arith.constant 2 : index
    %c0_14 = arith.constant 0 : index
    %c0_15 = arith.constant 0 : index
    %22 = vector.load %arg5[%c0_13, %c2, %c0_14, %c0_15] : memref<1x3x256x8xbf16, #tpu.memory_space<vmem>>, vector<1x1x256x8xbf16>
    %23 = vector.shape_cast %22 : vector<1x1x256x8xbf16> to vector<256x8xbf16>
    %24 = vector.shape_cast %21 : vector<256x8xbf16> to vector<1x1x256x8xbf16>
    tpu.vector_store %arg5[%c0_13, %c2, %c0_14, %c0_15], %24 {strides = array<i32>} : memref<1x3x256x8xbf16, #tpu.memory_space<vmem>>, vector<1x1x256x8xbf16>,
    return
  }
  func.func @transform_0(%arg0: i32, %arg1: i32) -> (i32, i32, i32) {
    %c0_i32 = arith.constant 0 : i32
    %c0_i32_0 = arith.constant 0 : i32
    return %arg0, %c0_i32, %arg1 : i32, i32, i32
  }
  func.func @transform_1(%arg0: i32, %arg1: i32) -> (i32, i32) {
    %c0_i32 = arith.constant 0 : i32
    %c0_i32_0 = arith.constant 0 : i32
    %c0_i32_1 = arith.constant 0 : i32
    return %c0_i32, %c0_i32_0 : i32, i32
  }
  func.func @transform_2(%arg0: i32, %arg1: i32) -> (i32, i32) {
    %c0_i32 = arith.constant 0 : i32
    %c0_i32_0 = arith.constant 0 : i32
    %c0_i32_1 = arith.constant 0 : i32
    return %c0_i32, %c0_i32_0 : i32, i32
  }
  func.func @transform_3(%arg0: i32, %arg1: i32) -> (i32, i32, i32, i32) {
    %c0_i32 = arith.constant 0 : i32
    %c0_i32_0 = arith.constant 0 : i32
    %c0_i32_1 = arith.constant 0 : i32
    return %arg0, %c0_i32, %arg1, %c0_i32_0 : i32, i32, i32, i32
  }
}

</mosaic_0001>

<llo_original>
// kernel: tpu_custom_call.1
$region0: #{tpu_custom_call.1}
  #allocation0 [shape = 'u32[]', space=smem, size = 0x4, offset = 0x4, fixed_abs, tag = 'smem constant byte address 0x4 - core index']
  #allocation1 [shape = 'u32[144,128]{1,0:T(1,128)}', space=vmem, size = 0x12000, scoped, tag = 'internal scratch']
  %s0 = inlined_call_operand.vmem [shape: bf16[2,4,256], index: 0, kind: input, shape index: {}]
  %s1 = inlined_call_operand.vmem [shape: bf16[24,4], index: 1, kind: input, shape index: {}]
  %s2 = inlined_call_operand.vmem [shape: f32[24,1], index: 2, kind: input, shape index: {}]
  %s3 = inlined_call_operand.vmem [shape: bf16[2,3,256,8], index: 3, kind: output, shape index: {}]
  %s4 = sld [smem:[#allocation0]]
  $region45: #{tpu_custom_call.1} parent=0
    _
  %s6 = ssub.s32 1, %s4
  %s7 = scalar_select 0, %s6, %s4
  loop: start=0, step=1, limit=4
  $region2: #{tpu_custom_call.1} parent=0 // loop_pre_header
    _
  $region3: #{tpu_custom_call.1} parent=0 // loop_header
    %s9 = sphi 0, %s13
    %p10 = scmp.ge.s32.totalorder %s9, 4
    %s16 = sphi 0, %s28
    %s17 = sphi 0, %s24
    %s18 = sphi 0, %s16
    %s19 = sphi 0, %s17
    %s20 = sphi 0, %s18
    %s21 = sphi 0, %s19
    %s33 = sphi 0, %s35
    %s36 = sphi 0, %s33
    %s37 = sphi 0, %s36
    %s53 = sphi 0, %s37
    %s57 = sphi 0, %s57
    %s59 = sphi 0, %s57
    %s60 = sphi 0, %s59
    %s74 = sphi 0, %s60
    %s78 = sphi 0, %s78
    %s80 = sphi 0, %s78
    %s81 = sphi 0, %s80
    %s95 = sphi 0, %s81
    %s103 = sphi 0, %s105
    %s106 = sphi 0, %s103
    %s107 = sphi 0, %s106
    %s123 = sphi 0, %s107
  $region4: #{tpu_custom_call.1} parent=0 // loop_header_branch
    %12 = sbr.rel (%p10) target = $region8
  $region5: #{tpu_custom_call.1} parent=0 // loop_body
    %s14 = ssub.s32 %s9, 1
    %s15 = ssub.s32 %s9, 2
    %s22 = sadd.s32 1, %s17
    %p23 = scmp.ge.s32.totalorder %s22, 1
    %s24 = scalar_select %p23, 0, %s22
    %s25 = sadd.s32 1, %s16
    %s26 = scalar_select %p23, %s25, %s16
    %p27 = scmp.ge.s32.totalorder %s26, 2
    %s28 = scalar_select %p27, 0, %s26
    %s29 = ssub.s32 %s16, %s28
    %s30 = ssub.s32 %s17, %s24
    %s31 = sor.u32 %s29, %s30
    %p32 = scmp.eq.s32.totalorder %s31, 0
    %s34 = sadd.s32 %s33, 1
    %s35 = scalar_select %p32, %s33, %s34
    %p38 = pneg %p32
    %p39 = scmp.eq.s32.totalorder %s9, 1
    %p40 = por %p38, %p39
    %p41 = scmp.ne.s32.totalorder %s33, %s36
    %p42 = scmp.eq.s32.totalorder %s9, 0
    %p43 = por %p41, %p42
    %p44 = scmp.ne.s32.totalorder %s33, %s36
    %p45 = scmp.eq.s32.totalorder %s14, 1
    %p46 = por %p44, %p45
    %p47 = scmp.ne.s32.totalorder %s36, %s37
    %p48 = scmp.eq.s32.totalorder %s14, 0
    %p49 = por %p47, %p48
    %p50 = scmp.ne.s32.totalorder %s36, %s37
    %p51 = scmp.eq.s32.totalorder %s15, 1
    %p52 = por %p50, %p51
    %p54 = scmp.ne.s32.totalorder %s37, %s53
    %p55 = scmp.eq.s32.totalorder %s15, 0
    %p56 = por %p54, %p55
    %s58 = sadd.s32 %s57, 1
    %p61 = scmp.eq.s32.totalorder %s9, 1
    %p62 = scmp.ne.s32.totalorder %s57, %s59
    %p63 = scmp.eq.s32.totalorder %s9, 0
    %p64 = por %p62, %p63
    %p65 = scmp.ne.s32.totalorder %s57, %s59
    %p66 = scmp.eq.s32.totalorder %s14, 1
    %p67 = por %p65, %p66
    %p68 = scmp.ne.s32.totalorder %s59, %s60
    %p69 = scmp.eq.s32.totalorder %s14, 0
    %p70 = por %p68, %p69
    %p71 = scmp.ne.s32.totalorder %s59, %s60
    %p72 = scmp.eq.s32.totalorder %s15, 1
    %p73 = por %p71, %p72
    %p75 = scmp.ne.s32.totalorder %s60, %s74
    %p76 = scmp.eq.s32.totalorder %s15, 0
    %p77 = por %p75, %p76
    %s79 = sadd.s32 %s78, 1
    %p82 = scmp.eq.s32.totalorder %s9, 1
    %p83 = scmp.ne.s32.totalorder %s78, %s80
    %p84 = scmp.eq.s32.totalorder %s9, 0
    %p85 = por %p83, %p84
    %p86 = scmp.ne.s32.totalorder %s78, %s80
    %p87 = scmp.eq.s32.totalorder %s14, 1
    %p88 = por %p86, %p87
    %p89 = scmp.ne.s32.totalorder %s80, %s81
    %p90 = scmp.eq.s32.totalorder %s14, 0
    %p91 = por %p89, %p90
    %p92 = scmp.ne.s32.totalorder %s80, %s81
    %p93 = scmp.eq.s32.totalorder %s15, 1
    %p94 = por %p92, %p93
    %p96 = scmp.ne.s32.totalorder %s81, %s95
    %p97 = scmp.eq.s32.totalorder %s15, 0
    %p98 = por %p96, %p97
    %s99 = ssub.s32 %s16, %s28
    %s100 = ssub.s32 %s17, %s24
    %s101 = sor.u32 %s99, %s100
    %p102 = scmp.eq.s32.totalorder %s101, 0
    %s104 = sadd.s32 %s103, 1
    %s105 = scalar_select %p102, %s103, %s104
    %p108 = pneg %p102
    %p109 = scmp.eq.s32.totalorder %s9, 1
    %p110 = por %p108, %p109
    %p111 = scmp.ne.s32.totalorder %s103, %s106
    %p112 = scmp.eq.s32.totalorder %s9, 0
    %p113 = por %p111, %p112
    %p114 = scmp.ne.s32.totalorder %s103, %s106
    %p115 = scmp.eq.s32.totalorder %s14, 1
    %p116 = por %p114, %p115
    %p117 = scmp.ne.s32.totalorder %s106, %s107
    %p118 = scmp.eq.s32.totalorder %s14, 0
    %p119 = por %p117, %p118
    %p120 = scmp.ne.s32.totalorder %s106, %s107
    %p121 = scmp.eq.s32.totalorder %s15, 1
    %p122 = por %p120, %p121
    %p124 = scmp.ne.s32.totalorder %s107, %s123
    %p125 = scmp.eq.s32.totalorder %s15, 0
    %p126 = por %p124, %p125
    %p127 = scmp.le.s32.totalorder 1, %s9
    %p128 = scmp.lt.s32.totalorder %s9, 3
    %p129 = pnand %p127, %p128
    %p130 = pneg %p129
    // Predicated region
    $region9: #{tpu_custom_call.1} parent=5 // pred_check
      _
    $region10: #{tpu_custom_call.1} parent=5 // pred_check_branch
      %132 = sbr.rel (%p129) target = $region12
    $region11: #{tpu_custom_call.1} parent=5 // pred_region
      %s133 = ssub.s32 %s9, 1
      // Predicated region
      $region13: #{tpu_custom_call.1} parent=11 // pred_check
        %p134 = pneg %p70
      $region14: #{tpu_custom_call.1} parent=11 // pred_check_branch
        %136 = sbr.rel (%p134) target = $region16
      $region15: #{tpu_custom_call.1} parent=11 // pred_region
        _
      $region16: #{tpu_custom_call.1} parent=11 // pred_fallthru
        _
      // Predicated region
      $region17: #{tpu_custom_call.1} parent=11 // pred_check
        %p137 = pneg %p91
      $region18: #{tpu_custom_call.1} parent=11 // pred_check_branch
        %139 = sbr.rel (%p137) target = $region20
      $region19: #{tpu_custom_call.1} parent=11 // pred_region
        _
      $region20: #{tpu_custom_call.1} parent=11 // pred_fallthru
        _
    $region12: #{tpu_custom_call.1} parent=5 // pred_fallthru
      _
    %p140 = scmp.lt.s32.totalorder %s9, 2
    // Predicated region
    $region21: #{tpu_custom_call.1} parent=5 // pred_check
      %p141 = pneg %p140
    $region22: #{tpu_custom_call.1} parent=5 // pred_check_branch
      %143 = sbr.rel (%p141) target = $region24
    $region23: #{tpu_custom_call.1} parent=5 // pred_region
      // Predicated region
      $region25: #{tpu_custom_call.1} parent=23 // pred_check
        %p144 = pneg %p43
      $region26: #{tpu_custom_call.1} parent=23 // pred_check_branch
        %146 = sbr.rel (%p144) target = $region28
      $region27: #{tpu_custom_call.1} parent=23 // pred_region
        %s147 = smul.u32 2, %s17
        %p148 = scmp.lt.s32.totalorder %s16, 1
        %s149 = scalar_select %p148, %s16, 1
        %p150 = scmp.lt.s32.totalorder %s147, 1
        %s151 = scalar_select %p150, %s147, 1
        %s152 = smul.addr %s149, 2
        %s153 = sadd.s32 %s151, %s152
        %s154 = smul.addr %s153, 2
        %s155 = scalar_lea.vmem %s0, %s154
        %s156 = smul.u32 2, %s17
      $region28: #{tpu_custom_call.1} parent=23 // pred_fallthru
        _
    $region24: #{tpu_custom_call.1} parent=5 // pred_fallthru
      _
    %p157 = scmp.le.s32.totalorder 1, %s9
    %p158 = scmp.lt.s32.totalorder %s9, 3
    %p159 = pnand %p157, %p158
    %p160 = pneg %p159
    // Predicated region
    $region29: #{tpu_custom_call.1} parent=5 // pred_check
      _
    $region30: #{tpu_custom_call.1} parent=5 // pred_check_branch
      %162 = sbr.rel (%p159) target = $region32
    $region31: #{tpu_custom_call.1} parent=5 // pred_region
      %s163 = ssub.s32 %s9, 1
      %s164 = smul.u32 2, %s19
      %p165 = scmp.lt.s32.totalorder %s18, 1
      %s166 = scalar_select %p165, %s18, 1
      %p167 = scmp.lt.s32.totalorder %s164, 1
      %s168 = scalar_select %p167, %s164, 1
      %s169 = smul.addr %s166, 2
      %s170 = sadd.s32 %s168, %s169
      %s171 = smul.addr %s170, 2
      %s172 = scalar_lea.vmem %s0, %s171
      %p173 = pneg %p49
      %p174 = pneg %p46
      %p175 = pneg %p70
      %p176 = pneg %p67
      %p177 = pneg %p91
      %p178 = pneg %p88
      %p179 = pneg %p119
      %p180 = pneg %p116
      %s181 = smul.u32 32, %s19
      %p182 = scmp.lt.s32.totalorder %s18, 1
      %s183 = scalar_select %p182, %s18, 1
      %p184 = scmp.lt.s32.totalorder %s181, 31
      %s185 = scalar_select %p184, %s181, 31
      %s186 = smul.addr %s183, 96
      %s187 = sadd.s32 %s185, %s186
      %s188 = smul.addr %s187, 4
      %s189 = scalar_lea.vmem %s3, %s188
      %s190 = smul.u32 2, %s19
      %p191 = scmp.lt.s32.totalorder %s18, 1
      %s192 = scalar_select %p191, %s18, 1
      %p193 = scmp.lt.s32.totalorder %s190, 1
      %s194 = scalar_select %p193, %s190, 1
      %s195 = smul.addr %s192, 2
      %s196 = sadd.s32 %s194, %s195
      %s197 = smul.addr %s196, 2
      %s198 = scalar_lea.vmem %s0, %s197
      %s199 = smul.u32 2, %s19
      %s200 = smul.u32 32, %s19
      %p201 = scmp.lt.s32.totalorder %s18, 1
      %s202 = scalar_select %p201, %s18, 1
      %p203 = scmp.lt.s32.totalorder %s200, 31
      %s204 = scalar_select %p203, %s200, 31
      %s205 = smul.addr %s202, 96
      %s206 = sadd.s32 %s204, %s205
      %s207 = smul.addr %s206, 4
      %s208 = scalar_lea.vmem %s3, %s207
      %s209 = smul.u32 32, %s19
      %v211 = vld [vmem:[%s1] sm:$0xf]
      %v212 = vld [vmem:[%s1 + $0x4] sm:$0xf]
      %v213 = vld [vmem:[%s1 + $0x8] sm:$0xf]
      %v214 = vld [vmem:[%s198] sm:$0xf]
      %v215 = vld [vmem:[%s2] sm:$0xff]
      %v216 = vld [vmem:[%s2 + $0x8] sm:$0xff]
      %v217 = vld [vmem:[%s2 + $0x10] sm:$0xff]
      %219 = vset.pattern.permute.xlu0 0
      %220 = vperm.xlu0 %219, %v215
      %v221 = vpop.permute.xlu0 %220
      %224 = vset.pattern.permute.xlu0 0
      %225 = vperm.xlu0 %224, %v216
      %v226 = vpop.permute.xlu0 %225
      %229 = vset.pattern.permute.xlu0 0
      %230 = vperm.xlu0 %229, %v217
      %v231 = vpop.permute.xlu0 %230
      %v236 = vunpack.c.l.b16 %v211
      %v237 = vunpack.c.l.b16 %v212
      %v238 = vunpack.c.l.b16 %v213
      %v239 = vpack.c.b16 %v237, %v236
      %v240 = vpack.c.b16 %v238, %v238
      %v243 = vunpack.c.l.s4 1983009808
      %v244 = vunpack.c.0.s8 %v243
      %v245 = vlaneseq
      %v246 = vshrl.u32 %v245, 7
      %v247 = vsub.s32 %v244, %v246
      %v248 = vrot.slane %v214, %v247
      %v249 = vcombine.high %v248, %v248
      %vm250 = vcmask 31744
      %v252 = vsel %vm250, %v239, 0
      %v255 = vsel %vm250, %v240, 0
      %vm257 = vcmask 1041408
      %v259 = vsel %vm257, %v248, 0
      %v262 = vsel %vm257, %v249, 0
      %264 = vmatprep.subr.bf16.mxu0 0
      %265 = vmatpush1.bf16.msra.mxu0 0
      %266 = vmatprep.subr.bf16.mxu0 0
      %267 = vmatpush1.bf16.msra.mxu0 0
      %268 = vmatprep.subr.bf16.mxu0 0
      %269 = vmatpush1.bf16.msra.mxu0 0
      %270 = vmatprep.subr.bf16.mxu0 0
      %271 = vmatpush1.bf16.msra.mxu0 0
      %272 = vmatprep.subr.bf16.mxu0 0
      %273 = vmatpush1.bf16.msra.mxu0 0
      %274 = vmatprep.subr.bf16.mxu0 0
      %275 = vmatpush1.bf16.msra.mxu0 0
      %276 = vmatprep.subr.bf16.mxu0 0
      %277 = vmatpush1.bf16.msra.mxu0 0
      %278 = vmatprep.subr.bf16.mxu0 %v262
      %279 = vmatpush1.bf16.msra.mxu0 %v259
      %280 = vmatprep.subr.bf16.mxu0 0
      %281 = vmatpush2.bf16.msra.mxu0 0
      %282 = vmatprep.subr.bf16.mxu0 0
      %283 = vmatpush2.bf16.msra.mxu0 0
      %284 = vmatprep.subr.bf16.mxu0 0
      %285 = vmatpush2.bf16.msra.mxu0 0
      %286 = vmatprep.subr.bf16.mxu0 0
      %287 = vmatpush2.bf16.msra.mxu0 0
      %288 = vmatprep.subr.bf16.mxu0 0
      %289 = vmatpush2.bf16.msra.mxu0 0
      %290 = vmatprep.subr.bf16.mxu0 0
      %291 = vmatpush2.bf16.msra.mxu0 0
      %292 = vmatprep.subr.bf16.mxu0 0
      %293 = vmatpush2.bf16.msra.mxu0 0
      %294 = vmatprep.subr.bf16.mxu0 0
      %295 = vmatpush2.bf16.msra.mxu0 0
      %296 = vmatprep.mubr.bf16.mxu0 0
      %297 = vmatmul.mubr.bf16.gmra.mxu0 %v252
      %v298 = vpop.f32.mrf.mxu0
      %v299 = vadd.f32 %v221, %v298
      %v300 = vpop.f32.mrf.mxu0
      %v301 = vadd.f32 %v221, %v300
      %v302 = vpop.f32.mrf.mxu0
      %v303 = vadd.f32 %v226, %v302
      %v304 = vpop.f32.mrf.mxu0
      %v305 = vadd.f32 %v226, %v304
      %306 = vmatprep.mubr.bf16.mxu0 0
      %307 = vmatmul.mubr.bf16.gmra.mxu0 %v255
      %v308 = vpop.f32.mrf.mxu0
      %v309 = vadd.f32 %v231, %v308
      %v310 = vpop.f32.mrf.mxu0
      %v311 = vadd.f32 %v231, %v310
      %v312 = vpop.f32.mrf.mxu0
      %v313 = vpop.f32.mrf.mxu0
      %314 = vdwg.mxu0
      %315 = vxpose.xlu0.b32.start [1/16] %v299, 128
      %316 = vxpose.xlu0.b32.cont [2/16] 0.0, 128
      %317 = vxpose.xlu0.b32.cont [3/16] 0.0, 128
      %318 = vxpose.xlu0.b32.cont [4/16] 0.0, 128
      %319 = vxpose.xlu0.b32.cont [5/16] 0.0, 128
      %320 = vxpose.xlu0.b32.cont [6/16] 0.0, 128
      %321 = vxpose.xlu0.b32.cont [7/16] 0.0, 128
      %322 = vxpose.xlu0.b32.cont [8/16] 0.0, 128
      %323 = vxpose.xlu0.b32.cont [9/16] 0.0, 128
      %324 = vxpose.xlu0.b32.cont [10/16] 0.0, 128
      %325 = vxpose.xlu0.b32.cont [11/16] 0.0, 128
      %326 = vxpose.xlu0.b32.cont [12/16] 0.0, 128
      %327 = vxpose.xlu0.b32.cont [13/16] 0.0, 128
      %328 = vxpose.xlu0.b32.cont [14/16] 0.0, 128
      %329 = vxpose.xlu0.b32.cont [15/16] 0.0, 128
      %330 = vxpose.xlu0.b32.end [16/16] 0.0, 128
      %v331 = vpop.trf.xlu0
      %v332 = vpop.trf.xlu0
      %v333 = vpop.trf.xlu0
      %v334 = vpop.trf.xlu0
      %v335 = vpop.trf.xlu0
      %v336 = vpop.trf.xlu0
      %v337 = vpop.trf.xlu0
      %v338 = vpop.trf.xlu0
      %v339 = vpop.trf.xlu0
      %v340 = vpop.trf.xlu0
      %v341 = vpop.trf.xlu0
      %v342 = vpop.trf.xlu0
      %v343 = vpop.trf.xlu0
      %v344 = vpop.trf.xlu0
      %v345 = vpop.trf.xlu0
      %v346 = vpop.trf.xlu0
      %347 = vxpose.xlu0.b32.start [1/16] %v301, 128
      %348 = vxpose.xlu0.b32.cont [2/16] 0.0, 128
      %349 = vxpose.xlu0.b32.cont [3/16] 0.0, 128
      %350 = vxpose.xlu0.b32.cont [4/16] 0.0, 128
      %351 = vxpose.xlu0.b32.cont [5/16] 0.0, 128
      %352 = vxpose.xlu0.b32.cont [6/16] 0.0, 128
      %353 = vxpose.xlu0.b32.cont [7/16] 0.0, 128
      %354 = vxpose.xlu0.b32.cont [8/16] 0.0, 128
      %355 = vxpose.xlu0.b32.cont [9/16] 0.0, 128
      %356 = vxpose.xlu0.b32.cont [10/16] 0.0, 128
      %357 = vxpose.xlu0.b32.cont [11/16] 0.0, 128
      %358 = vxpose.xlu0.b32.cont [12/16] 0.0, 128
      %359 = vxpose.xlu0.b32.cont [13/16] 0.0, 128
      %360 = vxpose.xlu0.b32.cont [14/16] 0.0, 128
      %361 = vxpose.xlu0.b32.cont [15/16] 0.0, 128
      %362 = vxpose.xlu0.b32.end [16/16] 0.0, 128
      %v363 = vpop.trf.xlu0
      %v364 = vpop.trf.xlu0
      %v365 = vpop.trf.xlu0
      %v366 = vpop.trf.xlu0
      %v367 = vpop.trf.xlu0
      %v368 = vpop.trf.xlu0
      %v369 = vpop.trf.xlu0
      %v370 = vpop.trf.xlu0
      %v371 = vpop.trf.xlu0
      %v372 = vpop.trf.xlu0
      %v373 = vpop.trf.xlu0
      %v374 = vpop.trf.xlu0
      %v375 = vpop.trf.xlu0
      %v376 = vpop.trf.xlu0
      %v377 = vpop.trf.xlu0
      %v378 = vpop.trf.xlu0
      %v379 = vpack.c.bf16 %v332, %v331
      %v380 = vpack.c.bf16 %v334, %v333
      %v381 = vpack.c.bf16 %v336, %v335
      %v382 = vpack.c.bf16 %v338, %v337
      %v383 = vpack.c.bf16 %v340, %v339
      %v384 = vpack.c.bf16 %v342, %v341
      %v385 = vpack.c.bf16 %v344, %v343
      %v386 = vpack.c.bf16 %v346, %v345
      %v387 = vpack.c.bf16 %v364, %v363
      %v388 = vpack.c.bf16 %v366, %v365
      %v389 = vpack.c.bf16 %v368, %v367
      %v390 = vpack.c.bf16 %v370, %v369
      %v391 = vpack.c.bf16 %v372, %v371
      %v392 = vpack.c.bf16 %v374, %v373
      %v393 = vpack.c.bf16 %v376, %v375
      %v394 = vpack.c.bf16 %v378, %v377
      %v411 = vunpack.c.l.b16 %v379
      %v412 = vunpack.c.h.b16 %v379
      %v413 = vunpack.c.l.b16 %v380
      %v414 = vunpack.c.h.b16 %v380
      %v415 = vunpack.c.l.b16 %v381
      %v416 = vunpack.c.h.b16 %v381
      %v417 = vunpack.c.l.b16 %v382
      %v418 = vunpack.c.h.b16 %v382
      %v419 = vunpack.c.l.b16 %v383
      %v420 = vunpack.c.h.b16 %v383
      %v421 = vunpack.c.l.b16 %v384
      %v422 = vunpack.c.h.b16 %v384
      %v423 = vunpack.c.l.b16 %v385
      %v424 = vunpack.c.h.b16 %v385
      %v425 = vunpack.c.l.b16 %v386
      %v426 = vunpack.c.h.b16 %v386
      %v427 = vunpack.c.l.b16 %v387
      %v428 = vunpack.c.h.b16 %v387
      %v429 = vunpack.c.l.b16 %v388
      %v430 = vunpack.c.h.b16 %v388
      %v431 = vunpack.c.l.b16 %v389
      %v432 = vunpack.c.h.b16 %v389
      %v433 = vunpack.c.l.b16 %v390
      %v434 = vunpack.c.h.b16 %v390
      %v435 = vunpack.c.l.b16 %v391
      %v436 = vunpack.c.h.b16 %v391
      %v437 = vunpack.c.l.b16 %v392
      %v438 = vunpack.c.h.b16 %v392
      %v439 = vunpack.c.l.b16 %v393
      %v440 = vunpack.c.h.b16 %v393
      %v441 = vunpack.c.l.b16 %v394
      %v442 = vunpack.c.h.b16 %v394
      %v443 = vpack.c.b16 %v411, %v411
      %v444 = vpack.c.b16 %v412, %v412
      %v445 = vpack.c.b16 %v413, %v413
      %v446 = vpack.c.b16 %v414, %v414
      %v447 = vpack.c.b16 %v415, %v415
      %v448 = vpack.c.b16 %v416, %v416
      %v449 = vpack.c.b16 %v417, %v417
      %v450 = vpack.c.b16 %v418, %v418
      %v451 = vpack.c.b16 %v419, %v419
      %v452 = vpack.c.b16 %v420, %v420
      %v453 = vpack.c.b16 %v421, %v421
      %v454 = vpack.c.b16 %v422, %v422
      %v455 = vpack.c.b16 %v423, %v423
      %v456 = vpack.c.b16 %v424, %v424
      %v457 = vpack.c.b16 %v425, %v425
      %v458 = vpack.c.b16 %v426, %v426
      %v459 = vpack.c.b16 %v427, %v427
      %v460 = vpack.c.b16 %v428, %v428
      %v461 = vpack.c.b16 %v429, %v429
      %v462 = vpack.c.b16 %v430, %v430
      %v463 = vpack.c.b16 %v431, %v431
      %v464 = vpack.c.b16 %v432, %v432
      %v465 = vpack.c.b16 %v433, %v433
      %v466 = vpack.c.b16 %v434, %v434
      %v467 = vpack.c.b16 %v435, %v435
      %v468 = vpack.c.b16 %v436, %v436
      %v469 = vpack.c.b16 %v437, %v437
      %v470 = vpack.c.b16 %v438, %v438
      %v471 = vpack.c.b16 %v439, %v439
      %v472 = vpack.c.b16 %v440, %v440
      %v473 = vpack.c.b16 %v441, %v441
      %v474 = vpack.c.b16 %v442, %v442
      %vm507 = vcmask 60416
      %508 = vst.msk [vmem:[%s208] sm:$0xf] %vm507, %v443
      %509 = vst.msk [vmem:[%s208 + $0x4] sm:$0xf] %vm507, %v444
      %510 = vst.msk [vmem:[%s208 + $0x8] sm:$0xf] %vm507, %v445
      %511 = vst.msk [vmem:[%s208 + $0xc] sm:$0xf] %vm507, %v446
      %512 = vst.msk [vmem:[%s208 + $0x10] sm:$0xf] %vm507, %v447
      %513 = vst.msk [vmem:[%s208 + $0x14] sm:$0xf] %vm507, %v448
      %514 = vst.msk [vmem:[%s208 + $0x18] sm:$0xf] %vm507, %v449
      %515 = vst.msk [vmem:[%s208 + $0x1c] sm:$0xf] %vm507, %v450
      %516 = vst.msk [vmem:[%s208 + $0x20] sm:$0xf] %vm507, %v451
      %517 = vst.msk [vmem:[%s208 + $0x24] sm:$0xf] %vm507, %v452
      %518 = vst.msk [vmem:[%s208 + $0x28] sm:$0xf] %vm507, %v453
      %519 = vst.msk [vmem:[%s208 + $0x2c] sm:$0xf] %vm507, %v454
      %520 = vst.msk [vmem:[%s208 + $0x30] sm:$0xf] %vm507, %v455
      %521 = vst.msk [vmem:[%s208 + $0x34] sm:$0xf] %vm507, %v456
      %522 = vst.msk [vmem:[%s208 + $0x38] sm:$0xf] %vm507, %v457
      %523 = vst.msk [vmem:[%s208 + $0x3c] sm:$0xf] %vm507, %v458
      %524 = vst.msk [vmem:[%s208 + $0x40] sm:$0xf] %vm507, %v459
      %525 = vst.msk [vmem:[%s208 + $0x44] sm:$0xf] %vm507, %v460
      %526 = vst.msk [vmem:[%s208 + $0x48] sm:$0xf] %vm507, %v461
      %527 = vst.msk [vmem:[%s208 + $0x4c] sm:$0xf] %vm507, %v462
      %528 = vst.msk [vmem:[%s208 + $0x50] sm:$0xf] %vm507, %v463
      %529 = vst.msk [vmem:[%s208 + $0x54] sm:$0xf] %vm507, %v464
      %530 = vst.msk [vmem:[%s208 + $0x58] sm:$0xf] %vm507, %v465
      %531 = vst.msk [vmem:[%s208 + $0x5c] sm:$0xf] %vm507, %v466
      %532 = vst.msk [vmem:[%s208 + $0x60] sm:$0xf] %vm507, %v467
      %533 = vst.msk [vmem:[%s208 + $0x64] sm:$0xf] %vm507, %v468
      %534 = vst.msk [vmem:[%s208 + $0x68] sm:$0xf] %vm507, %v469
      %535 = vst.msk [vmem:[%s208 + $0x6c] sm:$0xf] %vm507, %v470
      %536 = vst.msk [vmem:[%s208 + $0x70] sm:$0xf] %vm507, %v471
      %537 = vst.msk [vmem:[%s208 + $0x74] sm:$0xf] %vm507, %v472
      %538 = vst.msk [vmem:[%s208 + $0x78] sm:$0xf] %vm507, %v473
      %539 = vst.msk [vmem:[%s208 + $0x7c] sm:$0xf] %vm507, %v474
      %540 = vxpose.xlu0.b32.start [1/16] %v303, 128
      %541 = vxpose.xlu0.b32.cont [2/16] 0.0, 128
      %542 = vxpose.xlu0.b32.cont [3/16] 0.0, 128
      %543 = vxpose.xlu0.b32.cont [4/16] 0.0, 128
      %544 = vxpose.xlu0.b32.cont [5/16] 0.0, 128
      %545 = vxpose.xlu0.b32.cont [6/16] 0.0, 128
      %546 = vxpose.xlu0.b32.cont [7/16] 0.0, 128
      %547 = vxpose.xlu0.b32.cont [8/16] 0.0, 128
      %548 = vxpose.xlu0.b32.cont [9/16] 0.0, 128
      %549 = vxpose.xlu0.b32.cont [10/16] 0.0, 128
      %550 = vxpose.xlu0.b32.cont [11/16] 0.0, 128
      %551 = vxpose.xlu0.b32.cont [12/16] 0.0, 128
      %552 = vxpose.xlu0.b32.cont [13/16] 0.0, 128
      %553 = vxpose.xlu0.b32.cont [14/16] 0.0, 128
      %554 = vxpose.xlu0.b32.cont [15/16] 0.0, 128
      %555 = vxpose.xlu0.b32.end [16/16] 0.0, 128
      %v556 = vpop.trf.xlu0
      %v557 = vpop.trf.xlu0
      %v558 = vpop.trf.xlu0
      %v559 = vpop.trf.xlu0
      %v560 = vpop.trf.xlu0
      %v561 = vpop.trf.xlu0
      %v562 = vpop.trf.xlu0
      %v563 = vpop.trf.xlu0
      %v564 = vpop.trf.xlu0
      %v565 = vpop.trf.xlu0
      %v566 = vpop.trf.xlu0
      %v567 = vpop.trf.xlu0
      %v568 = vpop.trf.xlu0
      %v569 = vpop.trf.xlu0
      %v570 = vpop.trf.xlu0
      %v571 = vpop.trf.xlu0
      %572 = vxpose.xlu0.b32.start [1/16] %v305, 128
      %573 = vxpose.xlu0.b32.cont [2/16] 0.0, 128
      %574 = vxpose.xlu0.b32.cont [3/16] 0.0, 128
      %575 = vxpose.xlu0.b32.cont [4/16] 0.0, 128
      %576 = vxpose.xlu0.b32.cont [5/16] 0.0, 128
      %577 = vxpose.xlu0.b32.cont [6/16] 0.0, 128
      %578 = vxpose.xlu0.b32.cont [7/16] 0.0, 128
      %579 = vxpose.xlu0.b32.cont [8/16] 0.0, 128
      %580 = vxpose.xlu0.b32.cont [9/16] 0.0, 128
      %581 = vxpose.xlu0.b32.cont [10/16] 0.0, 128
      %582 = vxpose.xlu0.b32.cont [11/16] 0.0, 128
      %583 = vxpose.xlu0.b32.cont [12/16] 0.0, 128
      %584 = vxpose.xlu0.b32.cont [13/16] 0.0, 128
      %585 = vxpose.xlu0.b32.cont [14/16] 0.0, 128
      %586 = vxpose.xlu0.b32.cont [15/16] 0.0, 128
      %587 = vxpose.xlu0.b32.end [16/16] 0.0, 128
      %v588 = vpop.trf.xlu0
      %v589 = vpop.trf.xlu0
      %v590 = vpop.trf.xlu0
      %v591 = vpop.trf.xlu0
      %v592 = vpop.trf.xlu0
      %v593 = vpop.trf.xlu0
      %v594 = vpop.trf.xlu0
      %v595 = vpop.trf.xlu0
      %v596 = vpop.trf.xlu0
      %v597 = vpop.trf.xlu0
      %v598 = vpop.trf.xlu0
      %v599 = vpop.trf.xlu0
      %v600 = vpop.trf.xlu0
      %v601 = vpop.trf.xlu0
      %v602 = vpop.trf.xlu0
      %v603 = vpop.trf.xlu0
      %v604 = vpack.c.bf16 %v557, %v556
      %v605 = vpack.c.bf16 %v559, %v558
      %v606 = vpack.c.bf16 %v561, %v560
      %v607 = vpack.c.bf16 %v563, %v562
      %v608 = vpack.c.bf16 %v565, %v564
      %v609 = vpack.c.bf16 %v567, %v566
      %v610 = vpack.c.bf16 %v569, %v568
      %v611 = vpack.c.bf16 %v571, %v570
      %v612 = vpack.c.bf16 %v589, %v588
      %v613 = vpack.c.bf16 %v591, %v590
      %v614 = vpack.c.bf16 %v593, %v592
      %v615 = vpack.c.bf16 %v595, %v594
      %v616 = vpack.c.bf16 %v597, %v596
      %v617 = vpack.c.bf16 %v599, %v598
      %v618 = vpack.c.bf16 %v601, %v600
      %v619 = vpack.c.bf16 %v603, %v602
      %v636 = vunpack.c.l.b16 %v604
      %v637 = vunpack.c.h.b16 %v604
      %v638 = vunpack.c.l.b16 %v605
      %v639 = vunpack.c.h.b16 %v605
      %v640 = vunpack.c.l.b16 %v606
      %v641 = vunpack.c.h.b16 %v606
      %v642 = vunpack.c.l.b16 %v607
      %v643 = vunpack.c.h.b16 %v607
      %v644 = vunpack.c.l.b16 %v608
      %v645 = vunpack.c.h.b16 %v608
      %v646 = vunpack.c.l.b16 %v609
      %v647 = vunpack.c.h.b16 %v609
      %v648 = vunpack.c.l.b16 %v610
      %v649 = vunpack.c.h.b16 %v610
      %v650 = vunpack.c.l.b16 %v611
      %v651 = vunpack.c.h.b16 %v611
      %v652 = vunpack.c.l.b16 %v612
      %v653 = vunpack.c.h.b16 %v612
      %v654 = vunpack.c.l.b16 %v613
      %v655 = vunpack.c.h.b16 %v613
      %v656 = vunpack.c.l.b16 %v614
      %v657 = vunpack.c.h.b16 %v614
      %v658 = vunpack.c.l.b16 %v615
      %v659 = vunpack.c.h.b16 %v615
      %v660 = vunpack.c.l.b16 %v616
      %v661 = vunpack.c.h.b16 %v616
      %v662 = vunpack.c.l.b16 %v617
      %v663 = vunpack.c.h.b16 %v617
      %v664 = vunpack.c.l.b16 %v618
      %v665 = vunpack.c.h.b16 %v618
      %v666 = vunpack.c.l.b16 %v619
      %v667 = vunpack.c.h.b16 %v619
      %v668 = vpack.c.b16 %v636, %v636
      %v669 = vpack.c.b16 %v637, %v637
      %v670 = vpack.c.b16 %v638, %v638
      %v671 = vpack.c.b16 %v639, %v639
      %v672 = vpack.c.b16 %v640, %v640
      %v673 = vpack.c.b16 %v641, %v641
      %v674 = vpack.c.b16 %v642, %v642
      %v675 = vpack.c.b16 %v643, %v643
      %v676 = vpack.c.b16 %v644, %v644
      %v677 = vpack.c.b16 %v645, %v645
      %v678 = vpack.c.b16 %v646, %v646
      %v679 = vpack.c.b16 %v647, %v647
      %v680 = vpack.c.b16 %v648, %v648
      %v681 = vpack.c.b16 %v649, %v649
      %v682 = vpack.c.b16 %v650, %v650
      %v683 = vpack.c.b16 %v651, %v651
      %v684 = vpack.c.b16 %v652, %v652
      %v685 = vpack.c.b16 %v653, %v653
      %v686 = vpack.c.b16 %v654, %v654
      %v687 = vpack.c.b16 %v655, %v655
      %v688 = vpack.c.b16 %v656, %v656
      %v689 = vpack.c.b16 %v657, %v657
      %v690 = vpack.c.b16 %v658, %v658
      %v691 = vpack.c.b16 %v659, %v659
      %v692 = vpack.c.b16 %v660, %v660
      %v693 = vpack.c.b16 %v661, %v661
      %v694 = vpack.c.b16 %v662, %v662
      %v695 = vpack.c.b16 %v663, %v663
      %v696 = vpack.c.b16 %v664, %v664
      %v697 = vpack.c.b16 %v665, %v665
      %v698 = vpack.c.b16 %v666, %v666
      %v699 = vpack.c.b16 %v667, %v667
      %s732 = scalar_lea.vmem %s208, 128
      %733 = vst.msk [vmem:[%s732] sm:$0xf] %vm507, %v668
      %734 = vst.msk [vmem:[%s732 + $0x4] sm:$0xf] %vm507, %v669
      %735 = vst.msk [vmem:[%s732 + $0x8] sm:$0xf] %vm507, %v670
      %736 = vst.msk [vmem:[%s732 + $0xc] sm:$0xf] %vm507, %v671
      %737 = vst.msk [vmem:[%s732 + $0x10] sm:$0xf] %vm507, %v672
      %738 = vst.msk [vmem:[%s732 + $0x14] sm:$0xf] %vm507, %v673
      %739 = vst.msk [vmem:[%s732 + $0x18] sm:$0xf] %vm507, %v674
      %740 = vst.msk [vmem:[%s732 + $0x1c] sm:$0xf] %vm507, %v675
      %741 = vst.msk [vmem:[%s732 + $0x20] sm:$0xf] %vm507, %v676
      %742 = vst.msk [vmem:[%s732 + $0x24] sm:$0xf] %vm507, %v677
      %743 = vst.msk [vmem:[%s732 + $0x28] sm:$0xf] %vm507, %v678
      %744 = vst.msk [vmem:[%s732 + $0x2c] sm:$0xf] %vm507, %v679
      %745 = vst.msk [vmem:[%s732 + $0x30] sm:$0xf] %vm507, %v680
      %746 = vst.msk [vmem:[%s732 + $0x34] sm:$0xf] %vm507, %v681
      %747 = vst.msk [vmem:[%s732 + $0x38] sm:$0xf] %vm507, %v682
      %748 = vst.msk [vmem:[%s732 + $0x3c] sm:$0xf] %vm507, %v683
      %749 = vst.msk [vmem:[%s732 + $0x40] sm:$0xf] %vm507, %v684
      %750 = vst.msk [vmem:[%s732 + $0x44] sm:$0xf] %vm507, %v685
      %751 = vst.msk [vmem:[%s732 + $0x48] sm:$0xf] %vm507, %v686
      %752 = vst.msk [vmem:[%s732 + $0x4c] sm:$0xf] %vm507, %v687
      %753 = vst.msk [vmem:[%s732 + $0x50] sm:$0xf] %vm507, %v688
      %754 = vst.msk [vmem:[%s732 + $0x54] sm:$0xf] %vm507, %v689
      %755 = vst.msk [vmem:[%s732 + $0x58] sm:$0xf] %vm507, %v690
      %756 = vst.msk [vmem:[%s732 + $0x5c] sm:$0xf] %vm507, %v691
      %757 = vst.msk [vmem:[%s732 + $0x60] sm:$0xf] %vm507, %v692
      %758 = vst.msk [vmem:[%s732 + $0x64] sm:$0xf] %vm507, %v693
      %759 = vst.msk [vmem:[%s732 + $0x68] sm:$0xf] %vm507, %v694
      %760 = vst.msk [vmem:[%s732 + $0x6c] sm:$0xf] %vm507, %v695
      %761 = vst.msk [vmem:[%s732 + $0x70] sm:$0xf] %vm507, %v696
      %762 = vst.msk [vmem:[%s732 + $0x74] sm:$0xf] %vm507, %v697
      %763 = vst.msk [vmem:[%s732 + $0x78] sm:$0xf] %vm507, %v698
      %764 = vst.msk [vmem:[%s732 + $0x7c] sm:$0xf] %vm507, %v699
      %765 = vxpose.xlu0.b32.start [1/16] %v309, 128
      %766 = vxpose.xlu0.b32.cont [2/16] 0.0, 128
      %767 = vxpose.xlu0.b32.cont [3/16] 0.0, 128
      %768 = vxpose.xlu0.b32.cont [4/16] 0.0, 128
      %769 = vxpose.xlu0.b32.cont [5/16] 0.0, 128
      %770 = vxpose.xlu0.b32.cont [6/16] 0.0, 128
      %771 = vxpose.xlu0.b32.cont [7/16] 0.0, 128
      %772 = vxpose.xlu0.b32.cont [8/16] 0.0, 128
      %773 = vxpose.xlu0.b32.cont [9/16] 0.0, 128
      %774 = vxpose.xlu0.b32.cont [10/16] 0.0, 128
      %775 = vxpose.xlu0.b32.cont [11/16] 0.0, 128
      %776 = vxpose.xlu0.b32.cont [12/16] 0.0, 128
      %777 = vxpose.xlu0.b32.cont [13/16] 0.0, 128
      %778 = vxpose.xlu0.b32.cont [14/16] 0.0, 128
      %779 = vxpose.xlu0.b32.cont [15/16] 0.0, 128
      %780 = vxpose.xlu0.b32.end [16/16] 0.0, 128
      %v781 = vpop.trf.xlu0
      %v782 = vpop.trf.xlu0
      %v783 = vpop.trf.xlu0
      %v784 = vpop.trf.xlu0
      %v785 = vpop.trf.xlu0
      %v786 = vpop.trf.xlu0
      %v787 = vpop.trf.xlu0
      %v788 = vpop.trf.xlu0
      %v789 = vpop.trf.xlu0
      %v790 = vpop.trf.xlu0
      %v791 = vpop.trf.xlu0
      %v792 = vpop.trf.xlu0
      %v793 = vpop.trf.xlu0
      %v794 = vpop.trf.xlu0
      %v795 = vpop.trf.xlu0
      %v796 = vpop.trf.xlu0
      %797 = vxpose.xlu0.b32.start [1/16] %v311, 128
      %798 = vxpose.xlu0.b32.cont [2/16] 0.0, 128
      %799 = vxpose.xlu0.b32.cont [3/16] 0.0, 128
      %800 = vxpose.xlu0.b32.cont [4/16] 0.0, 128
      %801 = vxpose.xlu0.b32.cont [5/16] 0.0, 128
      %802 = vxpose.xlu0.b32.cont [6/16] 0.0, 128
      %803 = vxpose.xlu0.b32.cont [7/16] 0.0, 128
      %804 = vxpose.xlu0.b32.cont [8/16] 0.0, 128
      %805 = vxpose.xlu0.b32.cont [9/16] 0.0, 128
      %806 = vxpose.xlu0.b32.cont [10/16] 0.0, 128
      %807 = vxpose.xlu0.b32.cont [11/16] 0.0, 128
      %808 = vxpose.xlu0.b32.cont [12/16] 0.0, 128
      %809 = vxpose.xlu0.b32.cont [13/16] 0.0, 128
      %810 = vxpose.xlu0.b32.cont [14/16] 0.0, 128
      %811 = vxpose.xlu0.b32.cont [15/16] 0.0, 128
      %812 = vxpose.xlu0.b32.end [16/16] 0.0, 128
      %v813 = vpop.trf.xlu0
      %v814 = vpop.trf.xlu0
      %v815 = vpop.trf.xlu0
      %v816 = vpop.trf.xlu0
      %v817 = vpop.trf.xlu0
      %v818 = vpop.trf.xlu0
      %v819 = vpop.trf.xlu0
      %v820 = vpop.trf.xlu0
      %v821 = vpop.trf.xlu0
      %v822 = vpop.trf.xlu0
      %v823 = vpop.trf.xlu0
      %v824 = vpop.trf.xlu0
      %v825 = vpop.trf.xlu0
      %v826 = vpop.trf.xlu0
      %v827 = vpop.trf.xlu0
      %v828 = vpop.trf.xlu0
      %v829 = vpack.c.bf16 %v782, %v781
      %v830 = vpack.c.bf16 %v784, %v783
      %v831 = vpack.c.bf16 %v786, %v785
      %v832 = vpack.c.bf16 %v788, %v787
      %v833 = vpack.c.bf16 %v790, %v789
      %v834 = vpack.c.bf16 %v792, %v791
      %v835 = vpack.c.bf16 %v794, %v793
      %v836 = vpack.c.bf16 %v796, %v795
      %v837 = vpack.c.bf16 %v814, %v813
      %v838 = vpack.c.bf16 %v816, %v815
      %v839 = vpack.c.bf16 %v818, %v817
      %v840 = vpack.c.bf16 %v820, %v819
      %v841 = vpack.c.bf16 %v822, %v821
      %v842 = vpack.c.bf16 %v824, %v823
      %v843 = vpack.c.bf16 %v826, %v825
      %v844 = vpack.c.bf16 %v828, %v827
      %v861 = vunpack.c.l.b16 %v829
      %v862 = vunpack.c.h.b16 %v829
      %v863 = vunpack.c.l.b16 %v830
      %v864 = vunpack.c.h.b16 %v830
      %v865 = vunpack.c.l.b16 %v831
      %v866 = vunpack.c.h.b16 %v831
      %v867 = vunpack.c.l.b16 %v832
      %v868 = vunpack.c.h.b16 %v832
      %v869 = vunpack.c.l.b16 %v833
      %v870 = vunpack.c.h.b16 %v833
      %v871 = vunpack.c.l.b16 %v834
      %v872 = vunpack.c.h.b16 %v834
      %v873 = vunpack.c.l.b16 %v835
      %v874 = vunpack.c.h.b16 %v835
      %v875 = vunpack.c.l.b16 %v836
      %v876 = vunpack.c.h.b16 %v836
      %v877 = vunpack.c.l.b16 %v837
      %v878 = vunpack.c.h.b16 %v837
      %v879 = vunpack.c.l.b16 %v838
      %v880 = vunpack.c.h.b16 %v838
      %v881 = vunpack.c.l.b16 %v839
      %v882 = vunpack.c.h.b16 %v839
      %v883 = vunpack.c.l.b16 %v840
      %v884 = vunpack.c.h.b16 %v840
      %v885 = vunpack.c.l.b16 %v841
      %v886 = vunpack.c.h.b16 %v841
      %v887 = vunpack.c.l.b16 %v842
      %v888 = vunpack.c.h.b16 %v842
      %v889 = vunpack.c.l.b16 %v843
      %v890 = vunpack.c.h.b16 %v843
      %v891 = vunpack.c.l.b16 %v844
      %v892 = vunpack.c.h.b16 %v844
      %v893 = vpack.c.b16 %v861, %v861
      %v894 = vpack.c.b16 %v862, %v862
      %v895 = vpack.c.b16 %v863, %v863
      %v896 = vpack.c.b16 %v864, %v864
      %v897 = vpack.c.b16 %v865, %v865
      %v898 = vpack.c.b16 %v866, %v866
      %v899 = vpack.c.b16 %v867, %v867
      %v900 = vpack.c.b16 %v868, %v868
      %v901 = vpack.c.b16 %v869, %v869
      %v902 = vpack.c.b16 %v870, %v870
      %v903 = vpack.c.b16 %v871, %v871
      %v904 = vpack.c.b16 %v872, %v872
      %v905 = vpack.c.b16 %v873, %v873
      %v906 = vpack.c.b16 %v874, %v874
      %v907 = vpack.c.b16 %v875, %v875
      %v908 = vpack.c.b16 %v876, %v876
      %v909 = vpack.c.b16 %v877, %v877
      %v910 = vpack.c.b16 %v878, %v878
      %v911 = vpack.c.b16 %v879, %v879
      %v912 = vpack.c.b16 %v880, %v880
      %v913 = vpack.c.b16 %v881, %v881
      %v914 = vpack.c.b16 %v882, %v882
      %v915 = vpack.c.b16 %v883, %v883
      %v916 = vpack.c.b16 %v884, %v884
      %v917 = vpack.c.b16 %v885, %v885
      %v918 = vpack.c.b16 %v886, %v886
      %v919 = vpack.c.b16 %v887, %v887
      %v920 = vpack.c.b16 %v888, %v888
      %v921 = vpack.c.b16 %v889, %v889
      %v922 = vpack.c.b16 %v890, %v890
      %v923 = vpack.c.b16 %v891, %v891
      %v924 = vpack.c.b16 %v892, %v892
      %s957 = scalar_lea.vmem %s208, 256
      %958 = vst.msk [vmem:[%s957] sm:$0xf] %vm507, %v893
      %959 = vst.msk [vmem:[%s957 + $0x4] sm:$0xf] %vm507, %v894
      %960 = vst.msk [vmem:[%s957 + $0x8] sm:$0xf] %vm507, %v895
      %961 = vst.msk [vmem:[%s957 + $0xc] sm:$0xf] %vm507, %v896
      %962 = vst.msk [vmem:[%s957 + $0x10] sm:$0xf] %vm507, %v897
      %963 = vst.msk [vmem:[%s957 + $0x14] sm:$0xf] %vm507, %v898
      %964 = vst.msk [vmem:[%s957 + $0x18] sm:$0xf] %vm507, %v899
      %965 = vst.msk [vmem:[%s957 + $0x1c] sm:$0xf] %vm507, %v900
      %966 = vst.msk [vmem:[%s957 + $0x20] sm:$0xf] %vm507, %v901
      %967 = vst.msk [vmem:[%s957 + $0x24] sm:$0xf] %vm507, %v902
      %968 = vst.msk [vmem:[%s957 + $0x28] sm:$0xf] %vm507, %v903
      %969 = vst.msk [vmem:[%s957 + $0x2c] sm:$0xf] %vm507, %v904
      %970 = vst.msk [vmem:[%s957 + $0x30] sm:$0xf] %vm507, %v905
      %971 = vst.msk [vmem:[%s957 + $0x34] sm:$0xf] %vm507, %v906
      %972 = vst.msk [vmem:[%s957 + $0x38] sm:$0xf] %vm507, %v907
      %973 = vst.msk [vmem:[%s957 + $0x3c] sm:$0xf] %vm507, %v908
      %974 = vst.msk [vmem:[%s957 + $0x40] sm:$0xf] %vm507, %v909
      %975 = vst.msk [vmem:[%s957 + $0x44] sm:$0xf] %vm507, %v910
      %976 = vst.msk [vmem:[%s957 + $0x48] sm:$0xf] %vm507, %v911
      %977 = vst.msk [vmem:[%s957 + $0x4c] sm:$0xf] %vm507, %v912
      %978 = vst.msk [vmem:[%s957 + $0x50] sm:$0xf] %vm507, %v913
      %979 = vst.msk [vmem:[%s957 + $0x54] sm:$0xf] %vm507, %v914
      %980 = vst.msk [vmem:[%s957 + $0x58] sm:$0xf] %vm507, %v915
      %981 = vst.msk [vmem:[%s957 + $0x5c] sm:$0xf] %vm507, %v916
      %982 = vst.msk [vmem:[%s957 + $0x60] sm:$0xf] %vm507, %v917
      %983 = vst.msk [vmem:[%s957 + $0x64] sm:$0xf] %vm507, %v918
      %984 = vst.msk [vmem:[%s957 + $0x68] sm:$0xf] %vm507, %v919
      %985 = vst.msk [vmem:[%s957 + $0x6c] sm:$0xf] %vm507, %v920
      %986 = vst.msk [vmem:[%s957 + $0x70] sm:$0xf] %vm507, %v921
      %987 = vst.msk [vmem:[%s957 + $0x74] sm:$0xf] %vm507, %v922
      %988 = vst.msk [vmem:[%s957 + $0x78] sm:$0xf] %vm507, %v923
      %989 = vst.msk [vmem:[%s957 + $0x7c] sm:$0xf] %vm507, %v924
      %s990 = smul.u32 32, %s19
      %p991 = scmp.lt.s32.totalorder %s18, 1
      %s992 = scalar_select %p991, %s18, 1
      %p993 = scmp.lt.s32.totalorder %s990, 31
      %s994 = scalar_select %p993, %s990, 31
      %s995 = smul.addr %s992, 96
      %s996 = sadd.s32 %s994, %s995
      %s997 = smul.addr %s996, 4
      %s998 = scalar_lea.vmem %s3, %s997
      // Predicated region
      $region33: #{tpu_custom_call.1} parent=31 // pred_check
        %p999 = pneg %p116
      $region34: #{tpu_custom_call.1} parent=31 // pred_check_branch
        %1001 = sbr.rel (%p999) target = $region36
      $region35: #{tpu_custom_call.1} parent=31 // pred_region
        %s1002 = smul.u32 32, %s19
      $region36: #{tpu_custom_call.1} parent=31 // pred_fallthru
        _
    $region32: #{tpu_custom_call.1} parent=5 // pred_fallthru
      _
    %p1003 = scmp.le.s32.totalorder 2, %s9
    // Predicated region
    $region37: #{tpu_custom_call.1} parent=5 // pred_check
      %p1004 = pneg %p1003
    $region38: #{tpu_custom_call.1} parent=5 // pred_check_branch
      %1006 = sbr.rel (%p1004) target = $region40
    $region39: #{tpu_custom_call.1} parent=5 // pred_region
      %s1007 = ssub.s32 %s9, 2
      // Predicated region
      $region41: #{tpu_custom_call.1} parent=39 // pred_check
        %p1008 = pneg %p122
      $region42: #{tpu_custom_call.1} parent=39 // pred_check_branch
        %1010 = sbr.rel (%p1008) target = $region44
      $region43: #{tpu_custom_call.1} parent=39 // pred_region
        %s1011 = smul.u32 32, %s21
        %p1012 = scmp.lt.s32.totalorder %s20, 1
        %s1013 = scalar_select %p1012, %s20, 1
        %p1014 = scmp.lt.s32.totalorder %s1011, 31
        %s1015 = scalar_select %p1014, %s1011, 31
        %s1016 = smul.addr %s1013, 96
        %s1017 = sadd.s32 %s1015, %s1016
        %s1018 = smul.addr %s1017, 4
        %s1019 = scalar_lea.vmem %s3, %s1018
      $region44: #{tpu_custom_call.1} parent=39 // pred_fallthru
        _
    $region40: #{tpu_custom_call.1} parent=5 // pred_fallthru
      _
  $region6: #{tpu_custom_call.1} parent=0 // loop_footer
    %s13 = sadd.s32 1, %s9
  $region7: #{tpu_custom_call.1} parent=0 // loop_footer_branch
    %8 = sbr.rel target = $region3
  $region8: #{tpu_custom_call.1} parent=0 // loop_exit
    _

// kernel: tpu_custom_call.1
$region0: #{tpu_custom_call.1}
  #allocation0 [shape = 'u32[]', space=smem, size = 0x4, offset = 0x4, fixed_abs, tag = 'smem constant byte address 0x4 - core index']
  #allocation1 [shape = 'u32[144,128]{1,0:T(1,128)}', space=vmem, size = 0x12000, scoped, tag = 'internal scratch']
  %s0 = inlined_call_operand.vmem [shape: bf16[2,4,256], index: 0, kind: input, shape index: {}]
  %s1 = inlined_call_operand.vmem [shape: bf16[24,4], index: 1, kind: input, shape index: {}]
  %s2 = inlined_call_operand.vmem [shape: f32[24,1], index: 2, kind: input, shape index: {}]
  %s3 = inlined_call_operand.vmem [shape: bf16[2,3,256,8], index: 3, kind: output, shape index: {}]
  %s4 = sld [smem:[#allocation0]]
  $region45: #{tpu_custom_call.1} parent=0
    _
  %s6 = ssub.s32 1, %s4
  %s7 = scalar_select 0, %s6, %s4
  loop: start=0, step=1, limit=4
  $region2: #{tpu_custom_call.1} parent=0 // loop_pre_header
    _
  $region3: #{tpu_custom_call.1} parent=0 // loop_header
    %s9 = sphi 0, %s13
    %p10 = scmp.ge.s32.totalorder %s9, 4
    %s16 = sphi 0, %s28
    %s17 = sphi 0, %s24
    %s18 = sphi 0, %s16
    %s19 = sphi 0, %s17
    %s20 = sphi 0, %s18
    %s21 = sphi 0, %s19
    %s33 = sphi 0, %s35
    %s36 = sphi 0, %s33
    %s37 = sphi 0, %s36
    %s53 = sphi 0, %s37
    %s57 = sphi 0, %s57
    %s59 = sphi 0, %s57
    %s60 = sphi 0, %s59
    %s74 = sphi 0, %s60
    %s78 = sphi 0, %s78
    %s80 = sphi 0, %s78
    %s81 = sphi 0, %s80
    %s95 = sphi 0, %s81
    %s103 = sphi 0, %s105
    %s106 = sphi 0, %s103
    %s107 = sphi 0, %s106
    %s123 = sphi 0, %s107
  $region4: #{tpu_custom_call.1} parent=0 // loop_header_branch
    %12 = sbr.rel (%p10) target = $region8
  $region5: #{tpu_custom_call.1} parent=0 // loop_body
    %s14 = ssub.s32 %s9, 1
    %s15 = ssub.s32 %s9, 2
    %s22 = sadd.s32 1, %s17
    %p23 = scmp.ge.s32.totalorder %s22, 1
    %s24 = scalar_select %p23, 0, %s22
    %s25 = sadd.s32 1, %s16
    %s26 = scalar_select %p23, %s25, %s16
    %p27 = scmp.ge.s32.totalorder %s26, 2
    %s28 = scalar_select %p27, 0, %s26
    %s29 = ssub.s32 %s16, %s28
    %s30 = ssub.s32 %s17, %s24
    %s31 = sor.u32 %s29, %s30
    %p32 = scmp.eq.s32.totalorder %s31, 0
    %s34 = sadd.s32 %s33, 1
    %s35 = scalar_select %p32, %s33, %s34
    %p38 = pneg %p32
    %p39 = scmp.eq.s32.totalorder %s9, 1
    %p40 = por %p38, %p39
    %p41 = scmp.ne.s32.totalorder %s33, %s36
    %p42 = scmp.eq.s32.totalorder %s9, 0
    %p43 = por %p41, %p42
    %p44 = scmp.ne.s32.totalorder %s33, %s36
    %p45 = scmp.eq.s32.totalorder %s14, 1
    %p46 = por %p44, %p45
    %p47 = scmp.ne.s32.totalorder %s36, %s37
    %p48 = scmp.eq.s32.totalorder %s14, 0
    %p49 = por %p47, %p48
    %p50 = scmp.ne.s32.totalorder %s36, %s37
    %p51 = scmp.eq.s32.totalorder %s15, 1
    %p52 = por %p50, %p51
    %p54 = scmp.ne.s32.totalorder %s37, %s53
    %p55 = scmp.eq.s32.totalorder %s15, 0
    %p56 = por %p54, %p55
    %s58 = sadd.s32 %s57, 1
    %p61 = scmp.eq.s32.totalorder %s9, 1
    %p62 = scmp.ne.s32.totalorder %s57, %s59
    %p63 = scmp.eq.s32.totalorder %s9, 0
    %p64 = por %p62, %p63
    %p65 = scmp.ne.s32.totalorder %s57, %s59
    %p66 = scmp.eq.s32.totalorder %s14, 1
    %p67 = por %p65, %p66
    %p68 = scmp.ne.s32.totalorder %s59, %s60
    %p69 = scmp.eq.s32.totalorder %s14, 0
    %p70 = por %p68, %p69
    %p71 = scmp.ne.s32.totalorder %s59, %s60
    %p72 = scmp.eq.s32.totalorder %s15, 1
    %p73 = por %p71, %p72
    %p75 = scmp.ne.s32.totalorder %s60, %s74
    %p76 = scmp.eq.s32.totalorder %s15, 0
    %p77 = por %p75, %p76
    %s79 = sadd.s32 %s78, 1
    %p82 = scmp.eq.s32.totalorder %s9, 1
    %p83 = scmp.ne.s32.totalorder %s78, %s80
    %p84 = scmp.eq.s32.totalorder %s9, 0
    %p85 = por %p83, %p84
    %p86 = scmp.ne.s32.totalorder %s78, %s80
    %p87 = scmp.eq.s32.totalorder %s14, 1
    %p88 = por %p86, %p87
    %p89 = scmp.ne.s32.totalorder %s80, %s81
    %p90 = scmp.eq.s32.totalorder %s14, 0
    %p91 = por %p89, %p90
    %p92 = scmp.ne.s32.totalorder %s80, %s81
    %p93 = scmp.eq.s32.totalorder %s15, 1
    %p94 = por %p92, %p93
    %p96 = scmp.ne.s32.totalorder %s81, %s95
    %p97 = scmp.eq.s32.totalorder %s15, 0
    %p98 = por %p96, %p97
    %s99 = ssub.s32 %s16, %s28
    %s100 = ssub.s32 %s17, %s24
    %s101 = sor.u32 %s99, %s100
    %p102 = scmp.eq.s32.totalorder %s101, 0
    %s104 = sadd.s32 %s103, 1
    %s105 = scalar_select %p102, %s103, %s104
    %p108 = pneg %p102
    %p109 = scmp.eq.s32.totalorder %s9, 1
    %p110 = por %p108, %p109
    %p111 = scmp.ne.s32.totalorder %s103, %s106
    %p112 = scmp.eq.s32.totalorder %s9, 0
    %p113 = por %p111, %p112
    %p114 = scmp.ne.s32.totalorder %s103, %s106
    %p115 = scmp.eq.s32.totalorder %s14, 1
    %p116 = por %p114, %p115
    %p117 = scmp.ne.s32.totalorder %s106, %s107
    %p118 = scmp.eq.s32.totalorder %s14, 0
    %p119 = por %p117, %p118
    %p120 = scmp.ne.s32.totalorder %s106, %s107
    %p121 = scmp.eq.s32.totalorder %s15, 1
    %p122 = por %p120, %p121
    %p124 = scmp.ne.s32.totalorder %s107, %s123
    %p125 = scmp.eq.s32.totalorder %s15, 0
    %p126 = por %p124, %p125
    %p127 = scmp.le.s32.totalorder 1, %s9
    %p128 = scmp.lt.s32.totalorder %s9, 3
    %p129 = pnand %p127, %p128
    %p130 = pneg %p129
    // Predicated region
    $region9: #{tpu_custom_call.1} parent=5 // pred_check
      _
    $region10: #{tpu_custom_call.1} parent=5 // pred_check_branch
      %132 = sbr.rel (%p129) target = $region12
    $region11: #{tpu_custom_call.1} parent=5 // pred_region
      %s133 = ssub.s32 %s9, 1
      // Predicated region
      $region13: #{tpu_custom_call.1} parent=11 // pred_check
        %p134 = pneg %p70
      $region14: #{tpu_custom_call.1} parent=11 // pred_check_branch
        %136 = sbr.rel (%p134) target = $region16
      $region15: #{tpu_custom_call.1} parent=11 // pred_region
        _
      $region16: #{tpu_custom_call.1} parent=11 // pred_fallthru
        _
      // Predicated region
      $region17: #{tpu_custom_call.1} parent=11 // pred_check
        %p137 = pneg %p91
      $region18: #{tpu_custom_call.1} parent=11 // pred_check_branch
        %139 = sbr.rel (%p137) target = $region20
      $region19: #{tpu_custom_call.1} parent=11 // pred_region
        _
      $region20: #{tpu_custom_call.1} parent=11 // pred_fallthru
        _
    $region12: #{tpu_custom_call.1} parent=5 // pred_fallthru
      _
    %p140 = scmp.lt.s32.totalorder %s9, 2
    // Predicated region
    $region21: #{tpu_custom_call.1} parent=5 // pred_check
      %p141 = pneg %p140
    $region22: #{tpu_custom_call.1} parent=5 // pred_check_branch
      %143 = sbr.rel (%p141) target = $region24
    $region23: #{tpu_custom_call.1} parent=5 // pred_region
      // Predicated region
      $region25: #{tpu_custom_call.1} parent=23 // pred_check
        %p144 = pneg %p43
      $region26: #{tpu_custom_call.1} parent=23 // pred_check_branch
        %146 = sbr.rel (%p144) target = $region28
      $region27: #{tpu_custom_call.1} parent=23 // pred_region
        %s147 = smul.u32 2, %s17
        %p148 = scmp.lt.s32.totalorder %s16, 1
        %s149 = scalar_select %p148, %s16, 1
        %p150 = scmp.lt.s32.totalorder %s147, 1
        %s151 = scalar_select %p150, %s147, 1
        %s152 = smul.addr %s149, 2
        %s153 = sadd.s32 %s151, %s152
        %s154 = smul.addr %s153, 2
        %s155 = scalar_lea.vmem %s0, %s154
        %s156 = smul.u32 2, %s17
      $region28: #{tpu_custom_call.1} parent=23 // pred_fallthru
        _
    $region24: #{tpu_custom_call.1} parent=5 // pred_fallthru
      _
    %p157 = scmp.le.s32.totalorder 1, %s9
    %p158 = scmp.lt.s32.totalorder %s9, 3
    %p159 = pnand %p157, %p158
    %p160 = pneg %p159
    // Predicated region
    $region29: #{tpu_custom_call.1} parent=5 // pred_check
      _
    $region30: #{tpu_custom_call.1} parent=5 // pred_check_branch
      %162 = sbr.rel (%p159) target = $region32
    $region31: #{tpu_custom_call.1} parent=5 // pred_region
      %s163 = ssub.s32 %s9, 1
      %s164 = smul.u32 2, %s19
      %p165 = scmp.lt.s32.totalorder %s18, 1
      %s166 = scalar_select %p165, %s18, 1
      %p167 = scmp.lt.s32.totalorder %s164, 1
      %s168 = scalar_select %p167, %s164, 1
      %s169 = smul.addr %s166, 2
      %s170 = sadd.s32 %s168, %s169
      %s171 = smul.addr %s170, 2
      %s172 = scalar_lea.vmem %s0, %s171
      %p173 = pneg %p49
      %p174 = pneg %p46
      %p175 = pneg %p70
      %p176 = pneg %p67
      %p177 = pneg %p91
      %p178 = pneg %p88
      %p179 = pneg %p119
      %p180 = pneg %p116
      %s181 = smul.u32 32, %s19
      %p182 = scmp.lt.s32.totalorder %s18, 1
      %s183 = scalar_select %p182, %s18, 1
      %p184 = scmp.lt.s32.totalorder %s181, 31
      %s185 = scalar_select %p184, %s181, 31
      %s186 = smul.addr %s183, 96
      %s187 = sadd.s32 %s185, %s186
      %s188 = smul.addr %s187, 4
      %s189 = scalar_lea.vmem %s3, %s188
      %s190 = smul.u32 2, %s19
      %p191 = scmp.lt.s32.totalorder %s18, 1
      %s192 = scalar_select %p191, %s18, 1
      %p193 = scmp.lt.s32.totalorder %s190, 1
      %s194 = scalar_select %p193, %s190, 1
      %s195 = smul.addr %s192, 2
      %s196 = sadd.s32 %s194, %s195
      %s197 = smul.addr %s196, 2
      %s198 = scalar_lea.vmem %s0, %s197
      %s199 = smul.u32 2, %s19
      %s200 = smul.u32 32, %s19
      %p201 = scmp.lt.s32.totalorder %s18, 1
      %s202 = scalar_select %p201, %s18, 1
      %p203 = scmp.lt.s32.totalorder %s200, 31
      %s204 = scalar_select %p203, %s200, 31
      %s205 = smul.addr %s202, 96
      %s206 = sadd.s32 %s204, %s205
      %s207 = smul.addr %s206, 4
      %s208 = scalar_lea.vmem %s3, %s207
      %s209 = smul.u32 32, %s19
      %v211 = vld [vmem:[%s1] sm:$0xf]
      %v212 = vld [vmem:[%s1 + $0x4] sm:$0xf]
      %v213 = vld [vmem:[%s1 + $0x8] sm:$0xf]
      %v214 = vld [vmem:[%s198] sm:$0xf]
      %v215 = vld [vmem:[%s2] sm:$0xff]
      %v216 = vld [vmem:[%s2 + $0x8] sm:$0xff]
      %v217 = vld [vmem:[%s2 + $0x10] sm:$0xff]
      %219 = vset.pattern.permute.xlu0 0
      %220 = vperm.xlu0 %219, %v215
      %v221 = vpop.permute.xlu0 %220
      %224 = vset.pattern.permute.xlu0 0
      %225 = vperm.xlu0 %224, %v216
      %v226 = vpop.permute.xlu0 %225
      %229 = vset.pattern.permute.xlu0 0
      %230 = vperm.xlu0 %229, %v217
      %v231 = vpop.permute.xlu0 %230
      %v236 = vunpack.c.l.b16 %v211
      %v237 = vunpack.c.l.b16 %v212
      %v238 = vunpack.c.l.b16 %v213
      %v239 = vpack.c.b16 %v237, %v236
      %v240 = vpack.c.b16 %v238, %v238
      %v243 = vunpack.c.l.s4 1983009808
      %v244 = vunpack.c.0.s8 %v243
      %v245 = vlaneseq
      %v246 = vshrl.u32 %v245, 7
      %v247 = vsub.s32 %v244, %v246
      %v248 = vrot.slane %v214, %v247
      %v249 = vcombine.high %v248, %v248
      %vm250 = vcmask 31744
      %v252 = vsel %vm250, %v239, 0
      %v255 = vsel %vm250, %v240, 0
      %vm257 = vcmask 1041408
      %v259 = vsel %vm257, %v248, 0
      %v262 = vsel %vm257, %v249, 0
      %264 = vmatprep.subr.bf16.mxu0 0
      %265 = vmatpush1.bf16.msra.mxu0 0
      %266 = vmatprep.subr.bf16.mxu0 0
      %267 = vmatpush1.bf16.msra.mxu0 0
      %268 = vmatprep.subr.bf16.mxu0 0
      %269 = vmatpush1.bf16.msra.mxu0 0
      %270 = vmatprep.subr.bf16.mxu0 0
      %271 = vmatpush1.bf16.msra.mxu0 0
      %272 = vmatprep.subr.bf16.mxu0 0
      %273 = vmatpush1.bf16.msra.mxu0 0
      %274 = vmatprep.subr.bf16.mxu0 0
      %275 = vmatpush1.bf16.msra.mxu0 0
      %276 = vmatprep.subr.bf16.mxu0 0
      %277 = vmatpush1.bf16.msra.mxu0 0
      %278 = vmatprep.subr.bf16.mxu0 %v262
      %279 = vmatpush1.bf16.msra.mxu0 %v259
      %280 = vmatprep.subr.bf16.mxu0 0
      %281 = vmatpush2.bf16.msra.mxu0 0
      %282 = vmatprep.subr.bf16.mxu0 0
      %283 = vmatpush2.bf16.msra.mxu0 0
      %284 = vmatprep.subr.bf16.mxu0 0
      %285 = vmatpush2.bf16.msra.mxu0 0
      %286 = vmatprep.subr.bf16.mxu0 0
      %287 = vmatpush2.bf16.msra.mxu0 0
      %288 = vmatprep.subr.bf16.mxu0 0
      %289 = vmatpush2.bf16.msra.mxu0 0
      %290 = vmatprep.subr.bf16.mxu0 0
      %291 = vmatpush2.bf16.msra.mxu0 0
      %292 = vmatprep.subr.bf16.mxu0 0
      %293 = vmatpush2.bf16.msra.mxu0 0
      %294 = vmatprep.subr.bf16.mxu0 0
      %295 = vmatpush2.bf16.msra.mxu0 0
      %296 = vmatprep.mubr.bf16.mxu0 0
      %297 = vmatmul.mubr.bf16.gmra.mxu0 %v252
      %v298 = vpop.f32.mrf.mxu0
      %v299 = vadd.f32 %v221, %v298
      %v300 = vpop.f32.mrf.mxu0
      %v301 = vadd.f32 %v221, %v300
      %v302 = vpop.f32.mrf.mxu0
      %v303 = vadd.f32 %v226, %v302
      %v304 = vpop.f32.mrf.mxu0
      %v305 = vadd.f32 %v226, %v304
      %306 = vmatprep.mubr.bf16.mxu0 0
      %307 = vmatmul.mubr.bf16.gmra.mxu0 %v255
      %v308 = vpop.f32.mrf.mxu0
      %v309 = vadd.f32 %v231, %v308
      %v310 = vpop.f32.mrf.mxu0
      %v311 = vadd.f32 %v231, %v310
      %v312 = vpop.f32.mrf.mxu0
      %v313 = vpop.f32.mrf.mxu0
      %314 = vdwg.mxu0
      %315 = vxpose.xlu0.b32.start [1/16] %v299, 128
      %316 = vxpose.xlu0.b32.cont [2/16] 0.0, 128
      %317 = vxpose.xlu0.b32.cont [3/16] 0.0, 128
      %318 = vxpose.xlu0.b32.cont [4/16] 0.0, 128
      %319 = vxpose.xlu0.b32.cont [5/16] 0.0, 128
      %320 = vxpose.xlu0.b32.cont [6/16] 0.0, 128
      %321 = vxpose.xlu0.b32.cont [7/16] 0.0, 128
      %322 = vxpose.xlu0.b32.cont [8/16] 0.0, 128
      %323 = vxpose.xlu0.b32.cont [9/16] 0.0, 128
      %324 = vxpose.xlu0.b32.cont [10/16] 0.0, 128
      %325 = vxpose.xlu0.b32.cont [11/16] 0.0, 128
      %326 = vxpose.xlu0.b32.cont [12/16] 0.0, 128
      %327 = vxpose.xlu0.b32.cont [13/16] 0.0, 128
      %328 = vxpose.xlu0.b32.cont [14/16] 0.0, 128
      %329 = vxpose.xlu0.b32.cont [15/16] 0.0, 128
      %330 = vxpose.xlu0.b32.end [16/16] 0.0, 128
      %v331 = vpop.trf.xlu0
      %v332 = vpop.trf.xlu0
      %v333 = vpop.trf.xlu0
      %v334 = vpop.trf.xlu0
      %v335 = vpop.trf.xlu0
      %v336 = vpop.trf.xlu0
      %v337 = vpop.trf.xlu0
      %v338 = vpop.trf.xlu0
      %v339 = vpop.trf.xlu0
      %v340 = vpop.trf.xlu0
      %v341 = vpop.trf.xlu0
      %v342 = vpop.trf.xlu0
      %v343 = vpop.trf.xlu0
      %v344 = vpop.trf.xlu0
      %v345 = vpop.trf.xlu0
      %v346 = vpop.trf.xlu0
      %347 = vxpose.xlu0.b32.start [1/16] %v301, 128
      %348 = vxpose.xlu0.b32.cont [2/16] 0.0, 128
      %349 = vxpose.xlu0.b32.cont [3/16] 0.0, 128
      %350 = vxpose.xlu0.b32.cont [4/16] 0.0, 128
      %351 = vxpose.xlu0.b32.cont [5/16] 0.0, 128
      %352 = vxpose.xlu0.b32.cont [6/16] 0.0, 128
      %353 = vxpose.xlu0.b32.cont [7/16] 0.0, 128
      %354 = vxpose.xlu0.b32.cont [8/16] 0.0, 128
      %355 = vxpose.xlu0.b32.cont [9/16] 0.0, 128
      %356 = vxpose.xlu0.b32.cont [10/16] 0.0, 128
      %357 = vxpose.xlu0.b32.cont [11/16] 0.0, 128
      %358 = vxpose.xlu0.b32.cont [12/16] 0.0, 128
      %359 = vxpose.xlu0.b32.cont [13/16] 0.0, 128
      %360 = vxpose.xlu0.b32.cont [14/16] 0.0, 128
      %361 = vxpose.xlu0.b32.cont [15/16] 0.0, 128
      %362 = vxpose.xlu0.b32.end [16/16] 0.0, 128
      %v363 = vpop.trf.xlu0
      %v364 = vpop.trf.xlu0
      %v365 = vpop.trf.xlu0
      %v366 = vpop.trf.xlu0
      %v367 = vpop.trf.xlu0
      %v368 = vpop.trf.xlu0
      %v369 = vpop.trf.xlu0
      %v370 = vpop.trf.xlu0
      %v371 = vpop.trf.xlu0
      %v372 = vpop.trf.xlu0
      %v373 = vpop.trf.xlu0
      %v374 = vpop.trf.xlu0
      %v375 = vpop.trf.xlu0
      %v376 = vpop.trf.xlu0
      %v377 = vpop.trf.xlu0
      %v378 = vpop.trf.xlu0
      %v379 = vpack.c.bf16 %v332, %v331
      %v380 = vpack.c.bf16 %v334, %v333
      %v381 = vpack.c.bf16 %v336, %v335
      %v382 = vpack.c.bf16 %v338, %v337
      %v383 = vpack.c.bf16 %v340, %v339
      %v384 = vpack.c.bf16 %v342, %v341
      %v385 = vpack.c.bf16 %v344, %v343
      %v386 = vpack.c.bf16 %v346, %v345
      %v387 = vpack.c.bf16 %v364, %v363
      %v388 = vpack.c.bf16 %v366, %v365
      %v389 = vpack.c.bf16 %v368, %v367
      %v390 = vpack.c.bf16 %v370, %v369
      %v391 = vpack.c.bf16 %v372, %v371
      %v392 = vpack.c.bf16 %v374, %v373
      %v393 = vpack.c.bf16 %v376, %v375
      %v394 = vpack.c.bf16 %v378, %v377
      %v411 = vunpack.c.l.b16 %v379
      %v412 = vunpack.c.h.b16 %v379
      %v413 = vunpack.c.l.b16 %v380
      %v414 = vunpack.c.h.b16 %v380
      %v415 = vunpack.c.l.b16 %v381
      %v416 = vunpack.c.h.b16 %v381
      %v417 = vunpack.c.l.b16 %v382
      %v418 = vunpack.c.h.b16 %v382
      %v419 = vunpack.c.l.b16 %v383
      %v420 = vunpack.c.h.b16 %v383
      %v421 = vunpack.c.l.b16 %v384
      %v422 = vunpack.c.h.b16 %v384
      %v423 = vunpack.c.l.b16 %v385
      %v424 = vunpack.c.h.b16 %v385
      %v425 = vunpack.c.l.b16 %v386
      %v426 = vunpack.c.h.b16 %v386
      %v427 = vunpack.c.l.b16 %v387
      %v428 = vunpack.c.h.b16 %v387
      %v429 = vunpack.c.l.b16 %v388
      %v430 = vunpack.c.h.b16 %v388
      %v431 = vunpack.c.l.b16 %v389
      %v432 = vunpack.c.h.b16 %v389
      %v433 = vunpack.c.l.b16 %v390
      %v434 = vunpack.c.h.b16 %v390
      %v435 = vunpack.c.l.b16 %v391
      %v436 = vunpack.c.h.b16 %v391
      %v437 = vunpack.c.l.b16 %v392
      %v438 = vunpack.c.h.b16 %v392
      %v439 = vunpack.c.l.b16 %v393
      %v440 = vunpack.c.h.b16 %v393
      %v441 = vunpack.c.l.b16 %v394
      %v442 = vunpack.c.h.b16 %v394
      %v443 = vpack.c.b16 %v411, %v411
      %v444 = vpack.c.b16 %v412, %v412
      %v445 = vpack.c.b16 %v413, %v413
      %v446 = vpack.c.b16 %v414, %v414
      %v447 = vpack.c.b16 %v415, %v415
      %v448 = vpack.c.b16 %v416, %v416
      %v449 = vpack.c.b16 %v417, %v417
      %v450 = vpack.c.b16 %v418, %v418
      %v451 = vpack.c.b16 %v419, %v419
      %v452 = vpack.c.b16 %v420, %v420
      %v453 = vpack.c.b16 %v421, %v421
      %v454 = vpack.c.b16 %v422, %v422
      %v455 = vpack.c.b16 %v423, %v423
      %v456 = vpack.c.b16 %v424, %v424
      %v457 = vpack.c.b16 %v425, %v425
      %v458 = vpack.c.b16 %v426, %v426
      %v459 = vpack.c.b16 %v427, %v427
      %v460 = vpack.c.b16 %v428, %v428
      %v461 = vpack.c.b16 %v429, %v429
      %v462 = vpack.c.b16 %v430, %v430
      %v463 = vpack.c.b16 %v431, %v431
      %v464 = vpack.c.b16 %v432, %v432
      %v465 = vpack.c.b16 %v433, %v433
      %v466 = vpack.c.b16 %v434, %v434
      %v467 = vpack.c.b16 %v435, %v435
      %v468 = vpack.c.b16 %v436, %v436
      %v469 = vpack.c.b16 %v437, %v437
      %v470 = vpack.c.b16 %v438, %v438
      %v471 = vpack.c.b16 %v439, %v439
      %v472 = vpack.c.b16 %v440, %v440
      %v473 = vpack.c.b16 %v441, %v441
      %v474 = vpack.c.b16 %v442, %v442
      %vm507 = vcmask 60416
      %508 = vst.msk [vmem:[%s208] sm:$0xf] %vm507, %v443
      %509 = vst.msk [vmem:[%s208 + $0x4] sm:$0xf] %vm507, %v444
      %510 = vst.msk [vmem:[%s208 + $0x8] sm:$0xf] %vm507, %v445
      %511 = vst.msk [vmem:[%s208 + $0xc] sm:$0xf] %vm507, %v446
      %512 = vst.msk [vmem:[%s208 + $0x10] sm:$0xf] %vm507, %v447
      %513 = vst.msk [vmem:[%s208 + $0x14] sm:$0xf] %vm507, %v448
      %514 = vst.msk [vmem:[%s208 + $0x18] sm:$0xf] %vm507, %v449
      %515 = vst.msk [vmem:[%s208 + $0x1c] sm:$0xf] %vm507, %v450
      %516 = vst.msk [vmem:[%s208 + $0x20] sm:$0xf] %vm507, %v451
      %517 = vst.msk [vmem:[%s208 + $0x24] sm:$0xf] %vm507, %v452
      %518 = vst.msk [vmem:[%s208 + $0x28] sm:$0xf] %vm507, %v453
      %519 = vst.msk [vmem:[%s208 + $0x2c] sm:$0xf] %vm507, %v454
      %520 = vst.msk [vmem:[%s208 + $0x30] sm:$0xf] %vm507, %v455
      %521 = vst.msk [vmem:[%s208 + $0x34] sm:$0xf] %vm507, %v456
      %522 = vst.msk [vmem:[%s208 + $0x38] sm:$0xf] %vm507, %v457
      %523 = vst.msk [vmem:[%s208 + $0x3c] sm:$0xf] %vm507, %v458
      %524 = vst.msk [vmem:[%s208 + $0x40] sm:$0xf] %vm507, %v459
      %525 = vst.msk [vmem:[%s208 + $0x44] sm:$0xf] %vm507, %v460
      %526 = vst.msk [vmem:[%s208 + $0x48] sm:$0xf] %vm507, %v461
      %527 = vst.msk [vmem:[%s208 + $0x4c] sm:$0xf] %vm507, %v462
      %528 = vst.msk [vmem:[%s208 + $0x50] sm:$0xf] %vm507, %v463
      %529 = vst.msk [vmem:[%s208 + $0x54] sm:$0xf] %vm507, %v464
      %530 = vst.msk [vmem:[%s208 + $0x58] sm:$0xf] %vm507, %v465
      %531 = vst.msk [vmem:[%s208 + $0x5c] sm:$0xf] %vm507, %v466
      %532 = vst.msk [vmem:[%s208 + $0x60] sm:$0xf] %vm507, %v467
      %533 = vst.msk [vmem:[%s208 + $0x64] sm:$0xf] %vm507, %v468
      %534 = vst.msk [vmem:[%s208 + $0x68] sm:$0xf] %vm507, %v469
      %535 = vst.msk [vmem:[%s208 + $0x6c] sm:$0xf] %vm507, %v470
      %536 = vst.msk [vmem:[%s208 + $0x70] sm:$0xf] %vm507, %v471
      %537 = vst.msk [vmem:[%s208 + $0x74] sm:$0xf] %vm507, %v472
      %538 = vst.msk [vmem:[%s208 + $0x78] sm:$0xf] %vm507, %v473
      %539 = vst.msk [vmem:[%s208 + $0x7c] sm:$0xf] %vm507, %v474
      %540 = vxpose.xlu0.b32.start [1/16] %v303, 128
      %541 = vxpose.xlu0.b32.cont [2/16] 0.0, 128
      %542 = vxpose.xlu0.b32.cont [3/16] 0.0, 128
      %543 = vxpose.xlu0.b32.cont [4/16] 0.0, 128
      %544 = vxpose.xlu0.b32.cont [5/16] 0.0, 128
      %545 = vxpose.xlu0.b32.cont [6/16] 0.0, 128
      %546 = vxpose.xlu0.b32.cont [7/16] 0.0, 128
      %547 = vxpose.xlu0.b32.cont [8/16] 0.0, 128
      %548 = vxpose.xlu0.b32.cont [9/16] 0.0, 128
      %549 = vxpose.xlu0.b32.cont [10/16] 0.0, 128
      %550 = vxpose.xlu0.b32.cont [11/16] 0.0, 128
      %551 = vxpose.xlu0.b32.cont [12/16] 0.0, 128
      %552 = vxpose.xlu0.b32.cont [13/16] 0.0, 128
      %553 = vxpose.xlu0.b32.cont [14/16] 0.0, 128
      %554 = vxpose.xlu0.b32.cont [15/16] 0.0, 128
      %555 = vxpose.xlu0.b32.end [16/16] 0.0, 128
      %v556 = vpop.trf.xlu0
      %v557 = vpop.trf.xlu0
      %v558 = vpop.trf.xlu0
      %v559 = vpop.trf.xlu0
      %v560 = vpop.trf.xlu0
      %v561 = vpop.trf.xlu0
      %v562 = vpop.trf.xlu0
      %v563 = vpop.trf.xlu0
      %v564 = vpop.trf.xlu0
      %v565 = vpop.trf.xlu0
      %v566 = vpop.trf.xlu0
      %v567 = vpop.trf.xlu0
      %v568 = vpop.trf.xlu0
      %v569 = vpop.trf.xlu0
      %v570 = vpop.trf.xlu0
      %v571 = vpop.trf.xlu0
      %572 = vxpose.xlu0.b32.start [1/16] %v305, 128
      %573 = vxpose.xlu0.b32.cont [2/16] 0.0, 128
      %574 = vxpose.xlu0.b32.cont [3/16] 0.0, 128
      %575 = vxpose.xlu0.b32.cont [4/16] 0.0, 128
      %576 = vxpose.xlu0.b32.cont [5/16] 0.0, 128
      %577 = vxpose.xlu0.b32.cont [6/16] 0.0, 128
      %578 = vxpose.xlu0.b32.cont [7/16] 0.0, 128
      %579 = vxpose.xlu0.b32.cont [8/16] 0.0, 128
      %580 = vxpose.xlu0.b32.cont [9/16] 0.0, 128
      %581 = vxpose.xlu0.b32.cont [10/16] 0.0, 128
      %582 = vxpose.xlu0.b32.cont [11/16] 0.0, 128
      %583 = vxpose.xlu0.b32.cont [12/16] 0.0, 128
      %584 = vxpose.xlu0.b32.cont [13/16] 0.0, 128
      %585 = vxpose.xlu0.b32.cont [14/16] 0.0, 128
      %586 = vxpose.xlu0.b32.cont [15/16] 0.0, 128
      %587 = vxpose.xlu0.b32.end [16/16] 0.0, 128
      %v588 = vpop.trf.xlu0
      %v589 = vpop.trf.xlu0
      %v590 = vpop.trf.xlu0
      %v591 = vpop.trf.xlu0
      %v592 = vpop.trf.xlu0
      %v593 = vpop.trf.xlu0
      %v594 = vpop.trf.xlu0
      %v595 = vpop.trf.xlu0
      %v596 = vpop.trf.xlu0
      %v597 = vpop.trf.xlu0
      %v598 = vpop.trf.xlu0
      %v599 = vpop.trf.xlu0
      %v600 = vpop.trf.xlu0
      %v601 = vpop.trf.xlu0
      %v602 = vpop.trf.xlu0
      %v603 = vpop.trf.xlu0
      %v604 = vpack.c.bf16 %v557, %v556
      %v605 = vpack.c.bf16 %v559, %v558
      %v606 = vpack.c.bf16 %v561, %v560
      %v607 = vpack.c.bf16 %v563, %v562
      %v608 = vpack.c.bf16 %v565, %v564
      %v609 = vpack.c.bf16 %v567, %v566
      %v610 = vpack.c.bf16 %v569, %v568
      %v611 = vpack.c.bf16 %v571, %v570
      %v612 = vpack.c.bf16 %v589, %v588
      %v613 = vpack.c.bf16 %v591, %v590
      %v614 = vpack.c.bf16 %v593, %v592
      %v615 = vpack.c.bf16 %v595, %v594
      %v616 = vpack.c.bf16 %v597, %v596
      %v617 = vpack.c.bf16 %v599, %v598
      %v618 = vpack.c.bf16 %v601, %v600
      %v619 = vpack.c.bf16 %v603, %v602
      %v636 = vunpack.c.l.b16 %v604
      %v637 = vunpack.c.h.b16 %v604
      %v638 = vunpack.c.l.b16 %v605
      %v639 = vunpack.c.h.b16 %v605
      %v640 = vunpack.c.l.b16 %v606
      %v641 = vunpack.c.h.b16 %v606
      %v642 = vunpack.c.l.b16 %v607
      %v643 = vunpack.c.h.b16 %v607
      %v644 = vunpack.c.l.b16 %v608
      %v645 = vunpack.c.h.b16 %v608
      %v646 = vunpack.c.l.b16 %v609
      %v647 = vunpack.c.h.b16 %v609
      %v648 = vunpack.c.l.b16 %v610
      %v649 = vunpack.c.h.b16 %v610
      %v650 = vunpack.c.l.b16 %v611
      %v651 = vunpack.c.h.b16 %v611
      %v652 = vunpack.c.l.b16 %v612
      %v653 = vunpack.c.h.b16 %v612
      %v654 = vunpack.c.l.b16 %v613
      %v655 = vunpack.c.h.b16 %v613
      %v656 = vunpack.c.l.b16 %v614
      %v657 = vunpack.c.h.b16 %v614
      %v658 = vunpack.c.l.b16 %v615
      %v659 = vunpack.c.h.b16 %v615
      %v660 = vunpack.c.l.b16 %v616
      %v661 = vunpack.c.h.b16 %v616
      %v662 = vunpack.c.l.b16 %v617
      %v663 = vunpack.c.h.b16 %v617
      %v664 = vunpack.c.l.b16 %v618
      %v665 = vunpack.c.h.b16 %v618
      %v666 = vunpack.c.l.b16 %v619
      %v667 = vunpack.c.h.b16 %v619
      %v668 = vpack.c.b16 %v636, %v636
      %v669 = vpack.c.b16 %v637, %v637
      %v670 = vpack.c.b16 %v638, %v638
      %v671 = vpack.c.b16 %v639, %v639
      %v672 = vpack.c.b16 %v640, %v640
      %v673 = vpack.c.b16 %v641, %v641
      %v674 = vpack.c.b16 %v642, %v642
      %v675 = vpack.c.b16 %v643, %v643
      %v676 = vpack.c.b16 %v644, %v644
      %v677 = vpack.c.b16 %v645, %v645
      %v678 = vpack.c.b16 %v646, %v646
      %v679 = vpack.c.b16 %v647, %v647
      %v680 = vpack.c.b16 %v648, %v648
      %v681 = vpack.c.b16 %v649, %v649
      %v682 = vpack.c.b16 %v650, %v650
      %v683 = vpack.c.b16 %v651, %v651
      %v684 = vpack.c.b16 %v652, %v652
      %v685 = vpack.c.b16 %v653, %v653
      %v686 = vpack.c.b16 %v654, %v654
      %v687 = vpack.c.b16 %v655, %v655
      %v688 = vpack.c.b16 %v656, %v656
      %v689 = vpack.c.b16 %v657, %v657
      %v690 = vpack.c.b16 %v658, %v658
      %v691 = vpack.c.b16 %v659, %v659
      %v692 = vpack.c.b16 %v660, %v660
      %v693 = vpack.c.b16 %v661, %v661
      %v694 = vpack.c.b16 %v662, %v662
      %v695 = vpack.c.b16 %v663, %v663
      %v696 = vpack.c.b16 %v664, %v664
      %v697 = vpack.c.b16 %v665, %v665
      %v698 = vpack.c.b16 %v666, %v666
      %v699 = vpack.c.b16 %v667, %v667
      %s732 = scalar_lea.vmem %s208, 128
      %733 = vst.msk [vmem:[%s732] sm:$0xf] %vm507, %v668
      %734 = vst.msk [vmem:[%s732 + $0x4] sm:$0xf] %vm507, %v669
      %735 = vst.msk [vmem:[%s732 + $0x8] sm:$0xf] %vm507, %v670
      %736 = vst.msk [vmem:[%s732 + $0xc] sm:$0xf] %vm507, %v671
      %737 = vst.msk [vmem:[%s732 + $0x10] sm:$0xf] %vm507, %v672
      %738 = vst.msk [vmem:[%s732 + $0x14] sm:$0xf] %vm507, %v673
      %739 = vst.msk [vmem:[%s732 + $0x18] sm:$0xf] %vm507, %v674
      %740 = vst.msk [vmem:[%s732 + $0x1c] sm:$0xf] %vm507, %v675
      %741 = vst.msk [vmem:[%s732 + $0x20] sm:$0xf] %vm507, %v676
      %742 = vst.msk [vmem:[%s732 + $0x24] sm:$0xf] %vm507, %v677
      %743 = vst.msk [vmem:[%s732 + $0x28] sm:$0xf] %vm507, %v678
      %744 = vst.msk [vmem:[%s732 + $0x2c] sm:$0xf] %vm507, %v679
      %745 = vst.msk [vmem:[%s732 + $0x30] sm:$0xf] %vm507, %v680
      %746 = vst.msk [vmem:[%s732 + $0x34] sm:$0xf] %vm507, %v681
      %747 = vst.msk [vmem:[%s732 + $0x38] sm:$0xf] %vm507, %v682
      %748 = vst.msk [vmem:[%s732 + $0x3c] sm:$0xf] %vm507, %v683
      %749 = vst.msk [vmem:[%s732 + $0x40] sm:$0xf] %vm507, %v684
      %750 = vst.msk [vmem:[%s732 + $0x44] sm:$0xf] %vm507, %v685
      %751 = vst.msk [vmem:[%s732 + $0x48] sm:$0xf] %vm507, %v686
      %752 = vst.msk [vmem:[%s732 + $0x4c] sm:$0xf] %vm507, %v687
      %753 = vst.msk [vmem:[%s732 + $0x50] sm:$0xf] %vm507, %v688
      %754 = vst.msk [vmem:[%s732 + $0x54] sm:$0xf] %vm507, %v689
      %755 = vst.msk [vmem:[%s732 + $0x58] sm:$0xf] %vm507, %v690
      %756 = vst.msk [vmem:[%s732 + $0x5c] sm:$0xf] %vm507, %v691
      %757 = vst.msk [vmem:[%s732 + $0x60] sm:$0xf] %vm507, %v692
      %758 = vst.msk [vmem:[%s732 + $0x64] sm:$0xf] %vm507, %v693
      %759 = vst.msk [vmem:[%s732 + $0x68] sm:$0xf] %vm507, %v694
      %760 = vst.msk [vmem:[%s732 + $0x6c] sm:$0xf] %vm507, %v695
      %761 = vst.msk [vmem:[%s732 + $0x70] sm:$0xf] %vm507, %v696
      %762 = vst.msk [vmem:[%s732 + $0x74] sm:$0xf] %vm507, %v697
      %763 = vst.msk [vmem:[%s732 + $0x78] sm:$0xf] %vm507, %v698
      %764 = vst.msk [vmem:[%s732 + $0x7c] sm:$0xf] %vm507, %v699
      %765 = vxpose.xlu0.b32.start [1/16] %v309, 128
      %766 = vxpose.xlu0.b32.cont [2/16] 0.0, 128
      %767 = vxpose.xlu0.b32.cont [3/16] 0.0, 128
      %768 = vxpose.xlu0.b32.cont [4/16] 0.0, 128
      %769 = vxpose.xlu0.b32.cont [5/16] 0.0, 128
      %770 = vxpose.xlu0.b32.cont [6/16] 0.0, 128
      %771 = vxpose.xlu0.b32.cont [7/16] 0.0, 128
      %772 = vxpose.xlu0.b32.cont [8/16] 0.0, 128
      %773 = vxpose.xlu0.b32.cont [9/16] 0.0, 128
      %774 = vxpose.xlu0.b32.cont [10/16] 0.0, 128
      %775 = vxpose.xlu0.b32.cont [11/16] 0.0, 128
      %776 = vxpose.xlu0.b32.cont [12/16] 0.0, 128
      %777 = vxpose.xlu0.b32.cont [13/16] 0.0, 128
      %778 = vxpose.xlu0.b32.cont [14/16] 0.0, 128
      %779 = vxpose.xlu0.b32.cont [15/16] 0.0, 128
      %780 = vxpose.xlu0.b32.end [16/16] 0.0, 128
      %v781 = vpop.trf.xlu0
      %v782 = vpop.trf.xlu0
      %v783 = vpop.trf.xlu0
      %v784 = vpop.trf.xlu0
      %v785 = vpop.trf.xlu0
      %v786 = vpop.trf.xlu0
      %v787 = vpop.trf.xlu0
      %v788 = vpop.trf.xlu0
      %v789 = vpop.trf.xlu0
      %v790 = vpop.trf.xlu0
      %v791 = vpop.trf.xlu0
      %v792 = vpop.trf.xlu0
      %v793 = vpop.trf.xlu0
      %v794 = vpop.trf.xlu0
      %v795 = vpop.trf.xlu0
      %v796 = vpop.trf.xlu0
      %797 = vxpose.xlu0.b32.start [1/16] %v311, 128
      %798 = vxpose.xlu0.b32.cont [2/16] 0.0, 128
      %799 = vxpose.xlu0.b32.cont [3/16] 0.0, 128
      %800 = vxpose.xlu0.b32.cont [4/16] 0.0, 128
      %801 = vxpose.xlu0.b32.cont [5/16] 0.0, 128
      %802 = vxpose.xlu0.b32.cont [6/16] 0.0, 128
      %803 = vxpose.xlu0.b32.cont [7/16] 0.0, 128
      %804 = vxpose.xlu0.b32.cont [8/16] 0.0, 128
      %805 = vxpose.xlu0.b32.cont [9/16] 0.0, 128
      %806 = vxpose.xlu0.b32.cont [10/16] 0.0, 128
      %807 = vxpose.xlu0.b32.cont [11/16] 0.0, 128
      %808 = vxpose.xlu0.b32.cont [12/16] 0.0, 128
      %809 = vxpose.xlu0.b32.cont [13/16] 0.0, 128
      %810 = vxpose.xlu0.b32.cont [14/16] 0.0, 128
      %811 = vxpose.xlu0.b32.cont [15/16] 0.0, 128
      %812 = vxpose.xlu0.b32.end [16/16] 0.0, 128
      %v813 = vpop.trf.xlu0
      %v814 = vpop.trf.xlu0
      %v815 = vpop.trf.xlu0
      %v816 = vpop.trf.xlu0
      %v817 = vpop.trf.xlu0
      %v818 = vpop.trf.xlu0
      %v819 = vpop.trf.xlu0
      %v820 = vpop.trf.xlu0
      %v821 = vpop.trf.xlu0
      %v822 = vpop.trf.xlu0
      %v823 = vpop.trf.xlu0
      %v824 = vpop.trf.xlu0
      %v825 = vpop.trf.xlu0
      %v826 = vpop.trf.xlu0
      %v827 = vpop.trf.xlu0
      %v828 = vpop.trf.xlu0
      %v829 = vpack.c.bf16 %v782, %v781
      %v830 = vpack.c.bf16 %v784, %v783
      %v831 = vpack.c.bf16 %v786, %v785
      %v832 = vpack.c.bf16 %v788, %v787
      %v833 = vpack.c.bf16 %v790, %v789
      %v834 = vpack.c.bf16 %v792, %v791
      %v835 = vpack.c.bf16 %v794, %v793
      %v836 = vpack.c.bf16 %v796, %v795
      %v837 = vpack.c.bf16 %v814, %v813
      %v838 = vpack.c.bf16 %v816, %v815
      %v839 = vpack.c.bf16 %v818, %v817
      %v840 = vpack.c.bf16 %v820, %v819
      %v841 = vpack.c.bf16 %v822, %v821
      %v842 = vpack.c.bf16 %v824, %v823
      %v843 = vpack.c.bf16 %v826, %v825
      %v844 = vpack.c.bf16 %v828, %v827
      %v861 = vunpack.c.l.b16 %v829
      %v862 = vunpack.c.h.b16 %v829
      %v863 = vunpack.c.l.b16 %v830
      %v864 = vunpack.c.h.b16 %v830
      %v865 = vunpack.c.l.b16 %v831
      %v866 = vunpack.c.h.b16 %v831
      %v867 = vunpack.c.l.b16 %v832
      %v868 = vunpack.c.h.b16 %v832
      %v869 = vunpack.c.l.b16 %v833
      %v870 = vunpack.c.h.b16 %v833
      %v871 = vunpack.c.l.b16 %v834
      %v872 = vunpack.c.h.b16 %v834
      %v873 = vunpack.c.l.b16 %v835
      %v874 = vunpack.c.h.b16 %v835
      %v875 = vunpack.c.l.b16 %v836
      %v876 = vunpack.c.h.b16 %v836
      %v877 = vunpack.c.l.b16 %v837
      %v878 = vunpack.c.h.b16 %v837
      %v879 = vunpack.c.l.b16 %v838
      %v880 = vunpack.c.h.b16 %v838
      %v881 = vunpack.c.l.b16 %v839
      %v882 = vunpack.c.h.b16 %v839
      %v883 = vunpack.c.l.b16 %v840
      %v884 = vunpack.c.h.b16 %v840
      %v885 = vunpack.c.l.b16 %v841
      %v886 = vunpack.c.h.b16 %v841
      %v887 = vunpack.c.l.b16 %v842
      %v888 = vunpack.c.h.b16 %v842
      %v889 = vunpack.c.l.b16 %v843
      %v890 = vunpack.c.h.b16 %v843
      %v891 = vunpack.c.l.b16 %v844
      %v892 = vunpack.c.h.b16 %v844
      %v893 = vpack.c.b16 %v861, %v861
      %v894 = vpack.c.b16 %v862, %v862
      %v895 = vpack.c.b16 %v863, %v863
      %v896 = vpack.c.b16 %v864, %v864
      %v897 = vpack.c.b16 %v865, %v865
      %v898 = vpack.c.b16 %v866, %v866
      %v899 = vpack.c.b16 %v867, %v867
      %v900 = vpack.c.b16 %v868, %v868
      %v901 = vpack.c.b16 %v869, %v869
      %v902 = vpack.c.b16 %v870, %v870
      %v903 = vpack.c.b16 %v871, %v871
      %v904 = vpack.c.b16 %v872, %v872
      %v905 = vpack.c.b16 %v873, %v873
      %v906 = vpack.c.b16 %v874, %v874
      %v907 = vpack.c.b16 %v875, %v875
      %v908 = vpack.c.b16 %v876, %v876
      %v909 = vpack.c.b16 %v877, %v877
      %v910 = vpack.c.b16 %v878, %v878
      %v911 = vpack.c.b16 %v879, %v879
      %v912 = vpack.c.b16 %v880, %v880
      %v913 = vpack.c.b16 %v881, %v881
      %v914 = vpack.c.b16 %v882, %v882
      %v915 = vpack.c.b16 %v883, %v883
      %v916 = vpack.c.b16 %v884, %v884
      %v917 = vpack.c.b16 %v885, %v885
      %v918 = vpack.c.b16 %v886, %v886
      %v919 = vpack.c.b16 %v887, %v887
      %v920 = vpack.c.b16 %v888, %v888
      %v921 = vpack.c.b16 %v889, %v889
      %v922 = vpack.c.b16 %v890, %v890
      %v923 = vpack.c.b16 %v891, %v891
      %v924 = vpack.c.b16 %v892, %v892
      %s957 = scalar_lea.vmem %s208, 256
      %958 = vst.msk [vmem:[%s957] sm:$0xf] %vm507, %v893
      %959 = vst.msk [vmem:[%s957 + $0x4] sm:$0xf] %vm507, %v894
      %960 = vst.msk [vmem:[%s957 + $0x8] sm:$0xf] %vm507, %v895
      %961 = vst.msk [vmem:[%s957 + $0xc] sm:$0xf] %vm507, %v896
      %962 = vst.msk [vmem:[%s957 + $0x10] sm:$0xf] %vm507, %v897
      %963 = vst.msk [vmem:[%s957 + $0x14] sm:$0xf] %vm507, %v898
      %964 = vst.msk [vmem:[%s957 + $0x18] sm:$0xf] %vm507, %v899
      %965 = vst.msk [vmem:[%s957 + $0x1c] sm:$0xf] %vm507, %v900
      %966 = vst.msk [vmem:[%s957 + $0x20] sm:$0xf] %vm507, %v901
      %967 = vst.msk [vmem:[%s957 + $0x24] sm:$0xf] %vm507, %v902
      %968 = vst.msk [vmem:[%s957 + $0x28] sm:$0xf] %vm507, %v903
      %969 = vst.msk [vmem:[%s957 + $0x2c] sm:$0xf] %vm507, %v904
      %970 = vst.msk [vmem:[%s957 + $0x30] sm:$0xf] %vm507, %v905
      %971 = vst.msk [vmem:[%s957 + $0x34] sm:$0xf] %vm507, %v906
      %972 = vst.msk [vmem:[%s957 + $0x38] sm:$0xf] %vm507, %v907
      %973 = vst.msk [vmem:[%s957 + $0x3c] sm:$0xf] %vm507, %v908
      %974 = vst.msk [vmem:[%s957 + $0x40] sm:$0xf] %vm507, %v909
      %975 = vst.msk [vmem:[%s957 + $0x44] sm:$0xf] %vm507, %v910
      %976 = vst.msk [vmem:[%s957 + $0x48] sm:$0xf] %vm507, %v911
      %977 = vst.msk [vmem:[%s957 + $0x4c] sm:$0xf] %vm507, %v912
      %978 = vst.msk [vmem:[%s957 + $0x50] sm:$0xf] %vm507, %v913
      %979 = vst.msk [vmem:[%s957 + $0x54] sm:$0xf] %vm507, %v914
      %980 = vst.msk [vmem:[%s957 + $0x58] sm:$0xf] %vm507, %v915
      %981 = vst.msk [vmem:[%s957 + $0x5c] sm:$0xf] %vm507, %v916
      %982 = vst.msk [vmem:[%s957 + $0x60] sm:$0xf] %vm507, %v917
      %983 = vst.msk [vmem:[%s957 + $0x64] sm:$0xf] %vm507, %v918
      %984 = vst.msk [vmem:[%s957 + $0x68] sm:$0xf] %vm507, %v919
      %985 = vst.msk [vmem:[%s957 + $0x6c] sm:$0xf] %vm507, %v920
      %986 = vst.msk [vmem:[%s957 + $0x70] sm:$0xf] %vm507, %v921
      %987 = vst.msk [vmem:[%s957 + $0x74] sm:$0xf] %vm507, %v922
      %988 = vst.msk [vmem:[%s957 + $0x78] sm:$0xf] %vm507, %v923
      %989 = vst.msk [vmem:[%s957 + $0x7c] sm:$0xf] %vm507, %v924
      %s990 = smul.u32 32, %s19
      %p991 = scmp.lt.s32.totalorder %s18, 1
      %s992 = scalar_select %p991, %s18, 1
      %p993 = scmp.lt.s32.totalorder %s990, 31
      %s994 = scalar_select %p993, %s990, 31
      %s995 = smul.addr %s992, 96
      %s996 = sadd.s32 %s994, %s995
      %s997 = smul.addr %s996, 4
      %s998 = scalar_lea.vmem %s3, %s997
      // Predicated region
      $region33: #{tpu_custom_call.1} parent=31 // pred_check
        %p999 = pneg %p116
      $region34: #{tpu_custom_call.1} parent=31 // pred_check_branch
        %1001 = sbr.rel (%p999) target = $region36
      $region35: #{tpu_custom_call.1} parent=31 // pred_region
        %s1002 = smul.u32 32, %s19
      $region36: #{tpu_custom_call.1} parent=31 // pred_fallthru
        _
    $region32: #{tpu_custom_call.1} parent=5 // pred_fallthru
      _
    %p1003 = scmp.le.s32.totalorder 2, %s9
    // Predicated region
    $region37: #{tpu_custom_call.1} parent=5 // pred_check
      %p1004 = pneg %p1003
    $region38: #{tpu_custom_call.1} parent=5 // pred_check_branch
      %1006 = sbr.rel (%p1004) target = $region40
    $region39: #{tpu_custom_call.1} parent=5 // pred_region
      %s1007 = ssub.s32 %s9, 2
      // Predicated region
      $region41: #{tpu_custom_call.1} parent=39 // pred_check
        %p1008 = pneg %p122
      $region42: #{tpu_custom_call.1} parent=39 // pred_check_branch
        %1010 = sbr.rel (%p1008) target = $region44
      $region43: #{tpu_custom_call.1} parent=39 // pred_region
        %s1011 = smul.u32 32, %s21
        %p1012 = scmp.lt.s32.totalorder %s20, 1
        %s1013 = scalar_select %p1012, %s20, 1
        %p1014 = scmp.lt.s32.totalorder %s1011, 31
        %s1015 = scalar_select %p1014, %s1011, 31
        %s1016 = smul.addr %s1013, 96
        %s1017 = sadd.s32 %s1015, %s1016
        %s1018 = smul.addr %s1017, 4
        %s1019 = scalar_lea.vmem %s3, %s1018
      $region44: #{tpu_custom_call.1} parent=39 // pred_fallthru
        _
    $region40: #{tpu_custom_call.1} parent=5 // pred_fallthru
      _
  $region6: #{tpu_custom_call.1} parent=0 // loop_footer
    %s13 = sadd.s32 1, %s9
  $region7: #{tpu_custom_call.1} parent=0 // loop_footer_branch
    %8 = sbr.rel target = $region3
  $region8: #{tpu_custom_call.1} parent=0 // loop_exit
    _

</llo_original>
